<compile_context>
chip_gen: v5e
topology: v5e:2x2
jax: 0.10.0
libtpu: 0.0.40
codegen_flags: <defaults>
</compile_context>

<pallas_src>
import functools

import jax
import jax.numpy as jnp
from jax.experimental import pallas as pl
from jax.experimental.pallas import tpu as pltpu


def _round_up(a, b):
    return (a + b - 1) // b * b


def _default_elementwise_dtype():
    """bf16 elementwise on v6e/v7x (packed-bf16 VPU); f32 on v5e and older."""
    try:
        kind = jax.devices()[0].device_kind.lower()
    except Exception:
        return jnp.float32
    for tag in ("v2", "v3", "v4", "v5"):
        if tag in kind:
            return jnp.float32
    return jnp.bfloat16


def _rows_forward(x_ref, w1_ref, vecs_ref, b2_ref, lab_ref, *, elem_dtype, approx_gelu):
    """Per-row-tile classifier math. Returns (logit[T,1] f32, label[T,1] f32, score[T,1] i32)."""
    vecs = vecs_ref[...]                                   # [4, 2hs] f32 (b1, gamma, beta, w2)
    b1, gamma, beta, w2 = vecs[0:1], vecs[1:2], vecs[2:3], vecs[3:4]

    # Linear(hs -> 2hs): bf16 MXU with f32 accumulation.
    h = jnp.dot(x_ref[...], w1_ref[...], preferred_element_type=jnp.float32) + b1

    # LayerNorm(2hs), eps=1e-5: compute d = h - mu once and reuse it (one fewer VALU pass).
    mu = jnp.mean(h, axis=-1, keepdims=True)
    d = h - mu
    var = jnp.mean(d * d, axis=-1, keepdims=True)
    hn = d * jax.lax.rsqrt(var + 1e-5) * gamma + beta

    if approx_gelu:
        # Opt-in tanh GELU: transcendental goes to the EUP slot (relaxes torch parity).
        act = jax.nn.gelu(hn.astype(elem_dtype), approximate=True)
    else:
        # torch.nn.GELU() default (exact erf).  erf stays f32 (safe Mosaic lowering);
        # the surrounding multiplies run in elem_dtype (bf16 packed on v6e/v7x).
        phi = 0.5 * (jax.lax.erf(hn * 0.7071067811865476) + 1.0)
        act = hn.astype(elem_dtype) * phi.astype(elem_dtype)

    # Linear(2hs -> 1): width-1 output -> VPU multiply + lane reduction (skip the MXU),
    # accumulation in f32.
    prod = (act * w2.astype(elem_dtype)).astype(jnp.float32)
    pre = jnp.sum(prod, axis=-1, keepdims=True) + b2_ref[0, 0]                   # [T, 1]
    logit = jnp.exp(pre)

    lab = lab_ref[...]                                                           # [T, 1]
    # score = (logits.long() == labels.long())
    # TODO(synk): exp() overflow to +inf has platform-dependent int-cast semantics vs torch .long().
    score = (logit.astype(jnp.int32) == lab.astype(jnp.int32)).astype(jnp.int32)
    return logit, lab, score


def _object_count_kernel(x_ref, w1_ref, vecs_ref, b2_ref, lab_ref,
                         logit_ref, score_ref, *, elem_dtype, approx_gelu):
    """Streaming variant: per-row outputs only (grid axis 'parallel')."""
    logit, _, score = _rows_forward(x_ref, w1_ref, vecs_ref, b2_ref, lab_ref,
                                    elem_dtype=elem_dtype, approx_gelu=approx_gelu)
    logit_ref[...] = logit
    score_ref[...] = score


def _object_count_kernel_fused(x_ref, w1_ref, vecs_ref, b2_ref, lab_ref,
                               logit_ref, score_ref, loss_ref, acc_ref,
                               *, elem_dtype, approx_gelu, n_valid, tile_n):
    """Latency-bound variant: also folds masked L1 mean + accuracy into (1,1) accumulators."""
    i = pl.program_id(0)
    logit, lab, score = _rows_forward(x_ref, w1_ref, vecs_ref, b2_ref, lab_ref,
                                      elem_dtype=elem_dtype, approx_gelu=approx_gelu)
    logit_ref[...] = logit
    score_ref[...] = score

    # Mask padded rows (>= n_valid) out of the cross-tile reductions.
    row = i * tile_n + jax.lax.broadcasted_iota(jnp.int32, (tile_n, 1), 0)
    valid = row < n_valid
    l1_part = jnp.sum(jnp.where(valid, jnp.abs(logit - lab), 0.0),
                      axis=0, keepdims=True)                                     # [1, 1]
    acc_part = jnp.sum(jnp.where(valid, score, 0).astype(jnp.float32),
                       axis=0, keepdims=True)                                    # [1, 1]

    @pl.when(i == 0)
    def _():
        loss_ref[...] = jnp.zeros_like(loss_ref)
        acc_ref[...] = jnp.zeros_like(acc_ref)

    loss_ref[...] += l1_part
    acc_ref[...] += acc_part

    @pl.when(i == pl.num_programs(0) - 1)
    def _():
        loss_ref[...] = loss_ref[...] * (1.0 / n_valid)
        acc_ref[...] = acc_ref[...] * (1.0 / n_valid)


def object_count_pallas(cls_tokens, labels, params, *, tile_n=None, approx_gelu=False,
                        elementwise_dtype=None):
    """cls_tokens: [N, hs], labels: [N], params: classifier weights."""
    cls_tokens = jnp.asarray(cls_tokens)
    labels_f = jnp.asarray(labels).astype(jnp.float32).reshape(-1)
    n, hs = cls_tokens.shape
    h2 = params["w1"].shape[1]

    if elementwise_dtype is None:
        elementwise_dtype = _default_elementwise_dtype()

    # --- Row tiling: 256-512 rows per tile (amortizes ~0.35us/step overhead, fills the
    # 256-wide MXU M dim on v6e/v7x), multiples of 16 rows (bf16 packing), rebalanced
    # so the last tile is not mostly padding.
    if tile_n is None:
        tile_n = 512 if h2 <= 2048 else 256   # keep 4*tile_n*h2*4B of f32 intermediates modest (v7x)
    tile_n = max(16, _round_up(tile_n, 16))
    if n <= tile_n:
        tile_n = max(16, _round_up(n, 16))
        num_tiles = 1
    else:
        num_tiles = -(-n // tile_n)
        tile_n = _round_up(-(-n // num_tiles), 16)
        num_tiles = -(-n // tile_n)
    n_pad = num_tiles * tile_n
    # Small/latency-bound N: fold reductions into the kernel (forfeits megacore, which
    # does not pay at <=2 tiles).  Large N: 'parallel' grid + wrapper reductions.
    fuse = num_tiles <= 2

    # --- Pack operands (single pad/cast producer per array; one DMA for the 4 vectors).
    x = jnp.pad(cls_tokens.astype(jnp.bfloat16), ((0, n_pad - n), (0, 0)))        # [n_pad, hs]
    lab2d = jnp.pad(labels_f.reshape(n, 1), ((0, n_pad - n), (0, 0)))              # [n_pad, 1]
    w1 = params["w1"].astype(jnp.bfloat16)                                         # [hs, h2]
    vecs = jnp.stack(
        [params["b1"], params["gamma"], params["beta"], params["w2"].reshape(-1)],
        axis=0).astype(jnp.float32)                                                # [4, h2]
    b2 = params["b2"].reshape(1, 1).astype(jnp.float32)

    # --- VMEM budget: resident weights (ideally single-buffered) + streamed tiles +
    # f32 intermediates, clamped to 75% of the chip's VMEM (v7x has only 64 MiB).
    weight_bytes = w1.nbytes + vecs.nbytes
    stream_bytes = 2 * (tile_n * hs * 2 + tile_n * 4)          # double-buffered x + labels
    out_bytes = 2 * (tile_n * 8 + 8)                           # double-buffered logits/score (+acc)
    interm_bytes = 4 * tile_n * h2 * 4                         # f32 h/d/hn/act headroom
    vmem_est = int(1.4 * (2 * weight_bytes + stream_bytes + out_bytes + interm_bytes))
    try:
        vmem_cap = int(getattr(pltpu.get_tpu_info(), "vmem_capacity_bytes", 0)) or (64 << 20)
    except Exception:
        vmem_cap = 64 << 20                                    # conservative: v7x physical
    vmem_limit = min(max(vmem_est, 4 << 20), int(0.75 * vmem_cap))

    cost = pl.CostEstimate(
        flops=2 * n_pad * hs * h2 + 12 * n_pad * h2,
        transcendentals=n_pad * h2 + n_pad,                    # erf per element + exp per row
        bytes_accessed=(x.nbytes + w1.nbytes + vecs.nbytes + b2.nbytes + lab2d.nbytes
                        + n_pad * 8),
    )

    const = lambda i: (0, 0)    # grid-resident weights
    row = lambda i: (i, 0)      # streamed per row tile

    def _run(weight_mode):
        if weight_mode is None:
            w1_spec = pl.BlockSpec((hs, h2), const)
            vec_spec = pl.BlockSpec((4, h2), const)
        else:
            # Constant-index blocks are never re-DMA'd; single-buffer them to halve the
            # resident-weight VMEM footprint (matters most on v7x's 64 MiB).
            w1_spec = pl.BlockSpec((hs, h2), const, pipeline_mode=weight_mode)
            vec_spec = pl.BlockSpec((4, h2), const, pipeline_mode=weight_mode)
        in_specs = [
            pl.BlockSpec((tile_n, hs), row),                          # x
            w1_spec,                                                  # w1 (resident)
            vec_spec,                                                 # [b1; gamma; beta; w2]
            pl.BlockSpec(memory_space=pltpu.MemorySpace.SMEM),        # b2 scalar
            pl.BlockSpec((tile_n, 1), row),                           # labels
        ]
        if fuse:
            kernel = functools.partial(_object_count_kernel_fused,
                                       elem_dtype=elementwise_dtype,
                                       approx_gelu=approx_gelu,
                                       n_valid=n, tile_n=tile_n)
            out_shape = (jax.ShapeDtypeStruct((n_pad, 1), jnp.float32),
                         jax.ShapeDtypeStruct((n_pad, 1), jnp.int32),
                         jax.ShapeDtypeStruct((1, 1), jnp.float32),   # objects_num_loss
                         jax.ShapeDtypeStruct((1, 1), jnp.float32))   # accuracy
            out_specs = (pl.BlockSpec((tile_n, 1), row),
                         pl.BlockSpec((tile_n, 1), row),
                         pl.BlockSpec((1, 1), const),
                         pl.BlockSpec((1, 1), const))
            semantics = ("arbitrary",)
        else:
            kernel = functools.partial(_object_count_kernel,
                                       elem_dtype=elementwise_dtype,
                                       approx_gelu=approx_gelu)
            out_shape = (jax.ShapeDtypeStruct((n_pad, 1), jnp.float32),
                         jax.ShapeDtypeStruct((n_pad, 1), jnp.int32))
            out_specs = (pl.BlockSpec((tile_n, 1), row),
                         pl.BlockSpec((tile_n, 1), row))
            semantics = ("parallel",)
        return pl.pallas_call(
            kernel,
            out_shape=out_shape,
            grid=(num_tiles,),
            in_specs=in_specs,
            out_specs=out_specs,
            compiler_params=pltpu.CompilerParams(
                dimension_semantics=semantics,
                vmem_limit_bytes=vmem_limit),
            cost_estimate=cost,
        )(x, w1, vecs, b2, lab2d)

    try:
        outs = _run(pl.Buffered(1))        # single-buffered resident weights
    except Exception:
        outs = _run(None)                  # fallback: per-BlockSpec buffering not supported

    if fuse:
        logits2d, score2d, loss11, acc11 = outs
        objects_num_loss = loss11[0, 0]
        accuracy = acc11[0, 0]
    else:
        logits2d, score2d = outs

    object_logits = logits2d[:n, 0]
    score_i = score2d[:n, 0]
    score = score_i.astype(jnp.bool_)
    if not fuse:
        objects_num_loss = jnp.mean(jnp.abs(object_logits - labels_f))
        accuracy = jnp.sum(score_i) / n

    return {
        "object_logits": object_logits,
        "object_labels": labels_f,
        "objects_num_loss": objects_num_loss,
        "accuracy": accuracy,
        "score": score,
    }


def gather_cls_tokens(text_ids, text_feats, cls_labels):
    """Plain-JAX glue mirroring `feat[ids == 101]` per sequence.

    # TODO(synk): ragged (variable number of CLS tokens per sequence) has no static-shape
    # equivalent; we assume exactly one CLS (id==101) token per sequence.
    """
    cls_pos = jnp.argmax((text_ids == 101).astype(jnp.int32), axis=1)              # [B]
    cls_tokens = jnp.take_along_axis(
        text_feats, cls_pos[:, None, None], axis=1).squeeze(1)                     # [B, hs]
    labels = cls_labels.reshape(text_ids.shape[0], -1)[:, 0].astype(jnp.float32)   # [B]
    return cls_tokens, labels


def init_classifier_params(key, hs):
    k1, k2 = jax.random.split(key)
    h2 = hs * 2
    return {
        "w1": (jax.random.normal(k1, (hs, h2), jnp.float32) * 0.02),
        "b1": jnp.zeros((h2,), jnp.float32),
        "gamma": jnp.ones((h2,), jnp.float32),
        "beta": jnp.zeros((h2,), jnp.float32),
        "w2": (jax.random.normal(k2, (h2, 1), jnp.float32) * 0.02),
        "b2": jnp.zeros((1,), jnp.float32),
    }


def _reference(cls_tokens, labels, p, *, elem_dtype=jnp.float32, bf16_gemm=True,
               approx_gelu=False):
    """Pure-JAX reference of the same math (optionally matching the kernel's mixed precision)."""
    if bf16_gemm:
        h = jnp.dot(cls_tokens.astype(jnp.bfloat16), p["w1"].astype(jnp.bfloat16),
                    preferred_element_type=jnp.float32) + p["b1"]
    else:
        h = cls_tokens @ p["w1"] + p["b1"]
    mu = h.mean(-1, keepdims=True)
    d = h - mu
    var = (d * d).mean(-1, keepdims=True)
    hn = d * jax.lax.rsqrt(var + 1e-5) * p["gamma"] + p["beta"]
    if approx_gelu:
        act = jax.nn.gelu(hn.astype(elem_dtype), approximate=True)
    else:
        phi = 0.5 * (jax.lax.erf(hn * 0.7071067811865476) + 1.0)
        act = hn.astype(elem_dtype) * phi.astype(elem_dtype)
    w2 = p["w2"].reshape(1, -1).astype(elem_dtype)
    pre = jnp.sum((act * w2).astype(jnp.float32), axis=-1) + p["b2"][0]
    logit = jnp.exp(pre)
    loss = jnp.mean(jnp.abs(logit - labels))
    return logit, loss


if __name__ == "__main__":
    key = jax.random.PRNGKey(0)
    k_feat, k_param, k_lab, k_big = jax.random.split(key, 4)

    B, S, HS = 2, 8, 32  # batch, seq, img_feature_dim

    # Synthetic batch: CLS (id 101) at position 0 of every sequence.
    text_ids = jnp.concatenate(
        [jnp.full((B, 1), 101, jnp.int32),
         jax.random.randint(k_lab, (B, S - 1), 200, 30000, jnp.int32)], axis=1)
    text_feats = jax.random.normal(k_feat, (B, S, HS), jnp.float32)
    cls_labels = jax.random.randint(k_lab, (B,), 0, 5, jnp.int32).astype(jnp.float32)

    params = init_classifier_params(k_param, HS)
    elem_dtype = _default_elementwise_dtype()

    # --- Small / latency-bound case: fused in-kernel loss + accuracy path.
    cls_tokens, labels = gather_cls_tokens(text_ids, text_feats, cls_labels)
    out = object_count_pallas(cls_tokens, labels, params)
    jax.block_until_ready(out)

    ref_logits, ref_loss = _reference(cls_tokens, labels, params,
                                      elem_dtype=elem_dtype, bf16_gemm=True)
    assert jnp.allclose(out["object_logits"], ref_logits, rtol=1e-2, atol=1e-2)
    assert jnp.allclose(out["objects_num_loss"], ref_loss, rtol=1e-2, atol=1e-2)
    f32_logits, f32_loss = _reference(cls_tokens, labels, params,
                                      elem_dtype=jnp.float32, bf16_gemm=False)
    assert jnp.allclose(out["object_logits"], f32_logits, rtol=5e-2, atol=5e-2)
    assert jnp.allclose(out["objects_num_loss"], f32_loss, rtol=5e-2, atol=5e-2)

    # --- Larger-N case: exercises the streaming ("parallel") path with >2 row tiles.
    N2 = 200
    cls2 = jax.random.normal(k_big, (N2, HS), jnp.float32)
    lab2 = jax.random.randint(k_big, (N2,), 0, 5, jnp.int32).astype(jnp.float32)
    out2 = object_count_pallas(cls2, lab2, params, tile_n=64)
    jax.block_until_ready(out2)
    r2_logits, r2_loss = _reference(cls2, lab2, params,
                                    elem_dtype=elem_dtype, bf16_gemm=True)
    assert jnp.allclose(out2["object_logits"], r2_logits, rtol=1e-2, atol=1e-2)
    assert jnp.allclose(out2["objects_num_loss"], r2_loss, rtol=1e-2, atol=1e-2)

    print("KERNEL_OK")
</pallas_src>

<mosaic_0001>
module attributes {stable_mosaic.version = 11 : i64} {
  func.func @_object_count_kernel_fused(%arg0: i32, %arg1: memref<16x32xbf16, #tpu.memory_space<vmem>>, %arg2: memref<32x64xbf16, #tpu.memory_space<vmem>>, %arg3: memref<4x64xf32, #tpu.memory_space<vmem>>, %arg4: memref<1x1xf32, #tpu.memory_space<smem>>, %arg5: memref<16x1xf32, #tpu.memory_space<vmem>>, %arg6: memref<16x1xf32, #tpu.memory_space<vmem>>, %arg7: memref<16x1xi32, #tpu.memory_space<vmem>>, %arg8: memref<1x1xf32, #tpu.memory_space<vmem>>, %arg9: memref<1x1xf32, #tpu.memory_space<vmem>>) attributes {dimension_semantics = [#tpu.dimension_semantics<arbitrary>], iteration_bounds = array<i64: 1>, scalar_prefetch = 0 : i64, scratch_operands = 0 : i64, tpu.core_type = #tpu.core_type<tc>, window_params = [{transform_indices = @transform_0, window_bounds = array<i64: 16, 32>}, {pipeline_mode = #tpu.pipeline_mode<synchronous>, transform_indices = @transform_1, window_bounds = array<i64: 32, 64>}, {pipeline_mode = #tpu.pipeline_mode<synchronous>, transform_indices = @transform_2, window_bounds = array<i64: 4, 64>}, {transform_indices = @transform_3, window_bounds = array<i64: 1, 1>}, {transform_indices = @transform_4, window_bounds = array<i64: 16, 1>}, {transform_indices = @transform_5, window_bounds = array<i64: 16, 1>}, {transform_indices = @transform_6, window_bounds = array<i64: 16, 1>}, {pipeline_mode = #tpu.pipeline_mode<synchronous>, transform_indices = @transform_7, window_bounds = array<i64: 1, 1>}, {pipeline_mode = #tpu.pipeline_mode<synchronous>, transform_indices = @transform_8, window_bounds = array<i64: 1, 1>}]} {
    %c0 = arith.constant 0 : index
    %c0_0 = arith.constant 0 : index
    %0 = vector.load %arg3[%c0, %c0_0] : memref<4x64xf32, #tpu.memory_space<vmem>>, vector<4x64xf32>
    %1 = vector.extract_strided_slice %0 {offsets = [0, 0], sizes = [1, 64], strides = [1, 1]} : vector<4x64xf32> to vector<1x64xf32>
    %2 = vector.extract_strided_slice %0 {offsets = [1, 0], sizes = [1, 64], strides = [1, 1]} : vector<4x64xf32> to vector<1x64xf32>
    %3 = vector.extract_strided_slice %0 {offsets = [2, 0], sizes = [1, 64], strides = [1, 1]} : vector<4x64xf32> to vector<1x64xf32>
    %4 = vector.extract_strided_slice %0 {offsets = [3, 0], sizes = [1, 64], strides = [1, 1]} : vector<4x64xf32> to vector<1x64xf32>
    %c0_1 = arith.constant 0 : index
    %c0_2 = arith.constant 0 : index
    %5 = vector.load %arg1[%c0_1, %c0_2] : memref<16x32xbf16, #tpu.memory_space<vmem>>, vector<16x32xbf16>
    %c0_3 = arith.constant 0 : index
    %c0_4 = arith.constant 0 : index
    %6 = vector.load %arg2[%c0_3, %c0_4] : memref<32x64xbf16, #tpu.memory_space<vmem>>, vector<32x64xbf16>
    %cst = arith.constant dense<0.000000e+00> : vector<16x64xf32>
    %7 = tpu.matmul %5, %6, %cst {dimension_numbers = #tpu.dot_dimension_numbers<[1], [0], [0], [1], [0, 0, 1, 1], [], []>} : vector<16x32xbf16>, vector<32x64xbf16>, vector<16x64xf32> -> vector<16x64xf32>
    %8 = vector.broadcast %1 : vector<1x64xf32> to vector<16x64xf32>
    %9 = arith.addf %7, %8 : vector<16x64xf32>
    %cst_5 = arith.constant dense<0.000000e+00> : vector<16xf32>
    %10 = vector.multi_reduction <add>, %9, %cst_5 [1] : vector<16x64xf32> to vector<16xf32>
    %11 = vector.shape_cast %10 : vector<16xf32> to vector<16x1xf32>
    %cst_6 = arith.constant 6.400000e+01 : f32
    %12 = vector.broadcast %cst_6 : f32 to vector<16x1xf32>
    %13 = arith.divf %11, %12 : vector<16x1xf32>
    %14 = vector.broadcast %13 : vector<16x1xf32> to vector<16x64xf32>
    %15 = arith.subf %9, %14 : vector<16x64xf32>
    %16 = arith.mulf %15, %15 : vector<16x64xf32>
    %cst_7 = arith.constant dense<0.000000e+00> : vector<16xf32>
    %17 = vector.multi_reduction <add>, %16, %cst_7 [1] : vector<16x64xf32> to vector<16xf32>
    %18 = vector.shape_cast %17 : vector<16xf32> to vector<16x1xf32>
    %cst_8 = arith.constant 6.400000e+01 : f32
    %19 = vector.broadcast %cst_8 : f32 to vector<16x1xf32>
    %20 = arith.divf %18, %19 : vector<16x1xf32>
    %cst_9 = arith.constant 9.99999974E-6 : f32
    %21 = vector.broadcast %cst_9 : f32 to vector<16x1xf32>
    %22 = arith.addf %20, %21 : vector<16x1xf32>
    %23 = math.rsqrt %22 : vector<16x1xf32>
    %24 = vector.broadcast %23 : vector<16x1xf32> to vector<16x64xf32>
    %25 = arith.mulf %15, %24 : vector<16x64xf32>
    %26 = vector.broadcast %2 : vector<1x64xf32> to vector<16x64xf32>
    %27 = arith.mulf %25, %26 : vector<16x64xf32>
    %28 = vector.broadcast %3 : vector<1x64xf32> to vector<16x64xf32>
    %29 = arith.addf %27, %28 : vector<16x64xf32>
    %cst_10 = arith.constant 0.707106769 : f32
    %30 = vector.broadcast %cst_10 : f32 to vector<16x64xf32>
    %31 = arith.mulf %29, %30 : vector<16x64xf32>
    %32 = math.erf %31 : vector<16x64xf32>
    %cst_11 = arith.constant 1.000000e+00 : f32
    %33 = vector.broadcast %cst_11 : f32 to vector<16x64xf32>
    %34 = arith.addf %32, %33 : vector<16x64xf32>
    %cst_12 = arith.constant 5.000000e-01 : f32
    %35 = vector.broadcast %cst_12 : f32 to vector<16x64xf32>
    %36 = arith.mulf %35, %34 : vector<16x64xf32>
    %37 = arith.truncf %29 : vector<16x64xf32> to vector<16x64xbf16>
    %38 = arith.truncf %36 : vector<16x64xf32> to vector<16x64xbf16>
    %39 = arith.mulf %37, %38 : vector<16x64xbf16>
    %40 = arith.truncf %4 : vector<1x64xf32> to vector<1x64xbf16>
    %41 = vector.broadcast %40 : vector<1x64xbf16> to vector<16x64xbf16>
    %42 = arith.mulf %39, %41 : vector<16x64xbf16>
    %43 = arith.extf %42 : vector<16x64xbf16> to vector<16x64xf32>
    %cst_13 = arith.constant dense<0.000000e+00> : vector<16xf32>
    %44 = vector.multi_reduction <add>, %43, %cst_13 [1] : vector<16x64xf32> to vector<16xf32>
    %45 = vector.shape_cast %44 : vector<16xf32> to vector<16x1xf32>
    %c0_14 = arith.constant 0 : index
    %c0_15 = arith.constant 0 : index
    %46 = memref.load %arg4[%c0_14, %c0_15] : memref<1x1xf32, #tpu.memory_space<smem>>
    %47 = vector.broadcast %46 : f32 to vector<16x1xf32>
    %48 = arith.addf %45, %47 : vector<16x1xf32>
    %49 = math.exp %48 : vector<16x1xf32>
    %c0_16 = arith.constant 0 : index
    %c0_17 = arith.constant 0 : index
    %50 = vector.load %arg5[%c0_16, %c0_17] : memref<16x1xf32, #tpu.memory_space<vmem>>, vector<16x1xf32>
    %51 = arith.fptosi %49 : vector<16x1xf32> to vector<16x1xi32>
    %52 = arith.fptosi %50 : vector<16x1xf32> to vector<16x1xi32>
    %53 = arith.cmpi eq, %51, %52 : vector<16x1xi32>
    %54 = arith.extui %53 : vector<16x1xi1> to vector<16x1xi32>
    %c0_18 = arith.constant 0 : index
    %c0_19 = arith.constant 0 : index
    %55 = vector.load %arg6[%c0_18, %c0_19] : memref<16x1xf32, #tpu.memory_space<vmem>>, vector<16x1xf32>
    tpu.vector_store %arg6[%c0_18, %c0_19], %49 {strides = array<i32>} : memref<16x1xf32, #tpu.memory_space<vmem>>, vector<16x1xf32>,
    %c0_20 = arith.constant 0 : index
    %c0_21 = arith.constant 0 : index
    %56 = vector.load %arg7[%c0_20, %c0_21] : memref<16x1xi32, #tpu.memory_space<vmem>>, vector<16x1xi32>
    tpu.vector_store %arg7[%c0_20, %c0_21], %54 {strides = array<i32>} : memref<16x1xi32, #tpu.memory_space<vmem>>, vector<16x1xi32>,
    %c16_i32 = arith.constant 16 : i32
    %57 = arith.muli %arg0, %c16_i32 : i32
    %58 = tpu.iota {dimensions = array<i32: 0>} : vector<16x1xi32>
    %59 = vector.broadcast %57 : i32 to vector<16x1xi32>
    %60 = arith.addi %59, %58 : vector<16x1xi32>
    %c2_i32 = arith.constant 2 : i32
    %61 = vector.broadcast %c2_i32 : i32 to vector<16x1xi32>
    %62 = arith.cmpi slt, %60, %61 : vector<16x1xi32>
    %63 = arith.subf %49, %50 : vector<16x1xf32>
    %64 = math.absf %63 : vector<16x1xf32>
    %cst_22 = arith.constant 0.000000e+00 : f32
    %65 = vector.broadcast %cst_22 : f32 to vector<16x1xf32>
    %66 = arith.select %62, %64, %65 : vector<16x1xi1>, vector<16x1xf32>
    %cst_23 = arith.constant dense<0.000000e+00> : vector<1xf32>
    %67 = vector.multi_reduction <add>, %66, %cst_23 [0] : vector<16x1xf32> to vector<1xf32>
    %68 = vector.shape_cast %67 : vector<1xf32> to vector<1x1xf32>
    %c0_i32 = arith.constant 0 : i32
    %69 = vector.broadcast %c0_i32 : i32 to vector<16x1xi32>
    %70 = arith.select %62, %54, %69 : vector<16x1xi1>, vector<16x1xi32>
    %71 = arith.sitofp %70 : vector<16x1xi32> to vector<16x1xf32>
    %cst_24 = arith.constant dense<0.000000e+00> : vector<1xf32>
    %72 = vector.multi_reduction <add>, %71, %cst_24 [0] : vector<16x1xf32> to vector<1xf32>
    %73 = vector.shape_cast %72 : vector<1xf32> to vector<1x1xf32>
    %c0_i32_25 = arith.constant 0 : i32
    %74 = arith.cmpi eq, %arg0, %c0_i32_25 : i32
    %75 = arith.extui %74 : i1 to i32
    %c0_i32_26 = arith.constant 0 : i32
    %76 = arith.cmpi ne, %75, %c0_i32_26 : i32
    scf.if %76 {
      %cst_37 = arith.constant 0.000000e+00 : f32
      %86 = vector.broadcast %cst_37 : f32 to vector<1x1xf32>
      %c0_38 = arith.constant 0 : index
      %c0_39 = arith.constant 0 : index
      %87 = vector.load %arg8[%c0_38, %c0_39] : memref<1x1xf32, #tpu.memory_space<vmem>>, vector<1x1xf32>
      tpu.vector_store %arg8[%c0_38, %c0_39], %86 {strides = array<i32>} : memref<1x1xf32, #tpu.memory_space<vmem>>, vector<1x1xf32>,
      %cst_40 = arith.constant 0.000000e+00 : f32
      %88 = vector.broadcast %cst_40 : f32 to vector<1x1xf32>
      %c0_41 = arith.constant 0 : index
      %c0_42 = arith.constant 0 : index
      %89 = vector.load %arg9[%c0_41, %c0_42] : memref<1x1xf32, #tpu.memory_space<vmem>>, vector<1x1xf32>
      tpu.vector_store %arg9[%c0_41, %c0_42], %88 {strides = array<i32>} : memref<1x1xf32, #tpu.memory_space<vmem>>, vector<1x1xf32>,
    } else {
    }
    %c0_27 = arith.constant 0 : index
    %c0_28 = arith.constant 0 : index
    %77 = vector.load %arg8[%c0_27, %c0_28] : memref<1x1xf32, #tpu.memory_space<vmem>>, vector<1x1xf32>
    %78 = arith.addf %77, %68 : vector<1x1xf32>
    %c0_29 = arith.constant 0 : index
    %c0_30 = arith.constant 0 : index
    %79 = vector.load %arg8[%c0_29, %c0_30] : memref<1x1xf32, #tpu.memory_space<vmem>>, vector<1x1xf32>
    tpu.vector_store %arg8[%c0_29, %c0_30], %78 {strides = array<i32>} : memref<1x1xf32, #tpu.memory_space<vmem>>, vector<1x1xf32>,
    %c0_31 = arith.constant 0 : index
    %c0_32 = arith.constant 0 : index
    %80 = vector.load %arg9[%c0_31, %c0_32] : memref<1x1xf32, #tpu.memory_space<vmem>>, vector<1x1xf32>
    %81 = arith.addf %80, %73 : vector<1x1xf32>
    %c0_33 = arith.constant 0 : index
    %c0_34 = arith.constant 0 : index
    %82 = vector.load %arg9[%c0_33, %c0_34] : memref<1x1xf32, #tpu.memory_space<vmem>>, vector<1x1xf32>
    tpu.vector_store %arg9[%c0_33, %c0_34], %81 {strides = array<i32>} : memref<1x1xf32, #tpu.memory_space<vmem>>, vector<1x1xf32>,
    %c0_i32_35 = arith.constant 0 : i32
    %83 = arith.cmpi eq, %arg0, %c0_i32_35 : i32
    %84 = arith.extui %83 : i1 to i32
    %c0_i32_36 = arith.constant 0 : i32
    %85 = arith.cmpi ne, %84, %c0_i32_36 : i32
    scf.if %85 {
      %c0_37 = arith.constant 0 : index
      %c0_38 = arith.constant 0 : index
      %86 = vector.load %arg8[%c0_37, %c0_38] : memref<1x1xf32, #tpu.memory_space<vmem>>, vector<1x1xf32>
      %cst_39 = arith.constant 5.000000e-01 : f32
      %87 = vector.broadcast %cst_39 : f32 to vector<1x1xf32>
      %88 = arith.mulf %86, %87 : vector<1x1xf32>
      %c0_40 = arith.constant 0 : index
      %c0_41 = arith.constant 0 : index
      %89 = vector.load %arg8[%c0_40, %c0_41] : memref<1x1xf32, #tpu.memory_space<vmem>>, vector<1x1xf32>
      tpu.vector_store %arg8[%c0_40, %c0_41], %88 {strides = array<i32>} : memref<1x1xf32, #tpu.memory_space<vmem>>, vector<1x1xf32>,
      %c0_42 = arith.constant 0 : index
      %c0_43 = arith.constant 0 : index
      %90 = vector.load %arg9[%c0_42, %c0_43] : memref<1x1xf32, #tpu.memory_space<vmem>>, vector<1x1xf32>
      %cst_44 = arith.constant 5.000000e-01 : f32
      %91 = vector.broadcast %cst_44 : f32 to vector<1x1xf32>
      %92 = arith.mulf %90, %91 : vector<1x1xf32>
      %c0_45 = arith.constant 0 : index
      %c0_46 = arith.constant 0 : index
      %93 = vector.load %arg9[%c0_45, %c0_46] : memref<1x1xf32, #tpu.memory_space<vmem>>, vector<1x1xf32>
      tpu.vector_store %arg9[%c0_45, %c0_46], %92 {strides = array<i32>} : memref<1x1xf32, #tpu.memory_space<vmem>>, vector<1x1xf32>,
    } else {
    }
    return
  }
  func.func @transform_0(%arg0: i32) -> (i32, i32) {
    %c0_i32 = arith.constant 0 : i32
    %c0_i32_0 = arith.constant 0 : i32
    return %arg0, %c0_i32 : i32, i32
  }
  func.func @transform_1(%arg0: i32) -> (i32, i32) {
    %c0_i32 = arith.constant 0 : i32
    %c0_i32_0 = arith.constant 0 : i32
    %c0_i32_1 = arith.constant 0 : i32
    return %c0_i32, %c0_i32_0 : i32, i32
  }
  func.func @transform_2(%arg0: i32) -> (i32, i32) {
    %c0_i32 = arith.constant 0 : i32
    %c0_i32_0 = arith.constant 0 : i32
    %c0_i32_1 = arith.constant 0 : i32
    return %c0_i32, %c0_i32_0 : i32, i32
  }
  func.func @transform_3(%arg0: i32) -> (i32, i32) {
    %c0_i32 = arith.constant 0 : i32
    %c0_i32_0 = arith.constant 0 : i32
    %c0_i32_1 = arith.constant 0 : i32
    return %c0_i32, %c0_i32_0 : i32, i32
  }
  func.func @transform_4(%arg0: i32) -> (i32, i32) {
    %c0_i32 = arith.constant 0 : i32
    %c0_i32_0 = arith.constant 0 : i32
    return %arg0, %c0_i32 : i32, i32
  }
  func.func @transform_5(%arg0: i32) -> (i32, i32) {
    %c0_i32 = arith.constant 0 : i32
    %c0_i32_0 = arith.constant 0 : i32
    return %arg0, %c0_i32 : i32, i32
  }
  func.func @transform_6(%arg0: i32) -> (i32, i32) {
    %c0_i32 = arith.constant 0 : i32
    %c0_i32_0 = arith.constant 0 : i32
    return %arg0, %c0_i32 : i32, i32
  }
  func.func @transform_7(%arg0: i32) -> (i32, i32) {
    %c0_i32 = arith.constant 0 : i32
    %c0_i32_0 = arith.constant 0 : i32
    %c0_i32_1 = arith.constant 0 : i32
    return %c0_i32, %c0_i32_0 : i32, i32
  }
  func.func @transform_8(%arg0: i32) -> (i32, i32) {
    %c0_i32 = arith.constant 0 : i32
    %c0_i32_0 = arith.constant 0 : i32
    %c0_i32_1 = arith.constant 0 : i32
    return %c0_i32, %c0_i32_0 : i32, i32
  }
}

module attributes {stable_mosaic.version = 11 : i64} {
  func.func @_object_count_kernel_fused(%arg0: i32, %arg1: memref<16x32xbf16, #tpu.memory_space<vmem>>, %arg2: memref<32x64xbf16, #tpu.memory_space<vmem>>, %arg3: memref<4x64xf32, #tpu.memory_space<vmem>>, %arg4: memref<1x1xf32, #tpu.memory_space<smem>>, %arg5: memref<16x1xf32, #tpu.memory_space<vmem>>, %arg6: memref<16x1xf32, #tpu.memory_space<vmem>>, %arg7: memref<16x1xi32, #tpu.memory_space<vmem>>, %arg8: memref<1x1xf32, #tpu.memory_space<vmem>>, %arg9: memref<1x1xf32, #tpu.memory_space<vmem>>) attributes {dimension_semantics = [#tpu.dimension_semantics<arbitrary>], iteration_bounds = array<i64: 1>, scalar_prefetch = 0 : i64, scratch_operands = 0 : i64, tpu.core_type = #tpu.core_type<tc>, window_params = [{transform_indices = @transform_0, window_bounds = array<i64: 16, 32>}, {pipeline_mode = #tpu.pipeline_mode<synchronous>, transform_indices = @transform_1, window_bounds = array<i64: 32, 64>}, {pipeline_mode = #tpu.pipeline_mode<synchronous>, transform_indices = @transform_2, window_bounds = array<i64: 4, 64>}, {transform_indices = @transform_3, window_bounds = array<i64: 1, 1>}, {transform_indices = @transform_4, window_bounds = array<i64: 16, 1>}, {transform_indices = @transform_5, window_bounds = array<i64: 16, 1>}, {transform_indices = @transform_6, window_bounds = array<i64: 16, 1>}, {pipeline_mode = #tpu.pipeline_mode<synchronous>, transform_indices = @transform_7, window_bounds = array<i64: 1, 1>}, {pipeline_mode = #tpu.pipeline_mode<synchronous>, transform_indices = @transform_8, window_bounds = array<i64: 1, 1>}]} {
    %c0 = arith.constant 0 : index
    %c0_0 = arith.constant 0 : index
    %0 = vector.load %arg3[%c0, %c0_0] : memref<4x64xf32, #tpu.memory_space<vmem>>, vector<4x64xf32>
    %1 = vector.extract_strided_slice %0 {offsets = [0, 0], sizes = [1, 64], strides = [1, 1]} : vector<4x64xf32> to vector<1x64xf32>
    %2 = vector.extract_strided_slice %0 {offsets = [1, 0], sizes = [1, 64], strides = [1, 1]} : vector<4x64xf32> to vector<1x64xf32>
    %3 = vector.extract_strided_slice %0 {offsets = [2, 0], sizes = [1, 64], strides = [1, 1]} : vector<4x64xf32> to vector<1x64xf32>
    %4 = vector.extract_strided_slice %0 {offsets = [3, 0], sizes = [1, 64], strides = [1, 1]} : vector<4x64xf32> to vector<1x64xf32>
    %c0_1 = arith.constant 0 : index
    %c0_2 = arith.constant 0 : index
    %5 = vector.load %arg1[%c0_1, %c0_2] : memref<16x32xbf16, #tpu.memory_space<vmem>>, vector<16x32xbf16>
    %c0_3 = arith.constant 0 : index
    %c0_4 = arith.constant 0 : index
    %6 = vector.load %arg2[%c0_3, %c0_4] : memref<32x64xbf16, #tpu.memory_space<vmem>>, vector<32x64xbf16>
    %cst = arith.constant dense<0.000000e+00> : vector<16x64xf32>
    %7 = tpu.matmul %5, %6, %cst {dimension_numbers = #tpu.dot_dimension_numbers<[1], [0], [0], [1], [0, 0, 1, 1], [], []>} : vector<16x32xbf16>, vector<32x64xbf16>, vector<16x64xf32> -> vector<16x64xf32>
    %8 = vector.broadcast %1 : vector<1x64xf32> to vector<16x64xf32>
    %9 = arith.addf %7, %8 : vector<16x64xf32>
    %cst_5 = arith.constant dense<0.000000e+00> : vector<16xf32>
    %10 = vector.multi_reduction <add>, %9, %cst_5 [1] : vector<16x64xf32> to vector<16xf32>
    %11 = vector.shape_cast %10 : vector<16xf32> to vector<16x1xf32>
    %cst_6 = arith.constant 6.400000e+01 : f32
    %12 = vector.broadcast %cst_6 : f32 to vector<16x1xf32>
    %13 = arith.divf %11, %12 : vector<16x1xf32>
    %14 = vector.broadcast %13 : vector<16x1xf32> to vector<16x64xf32>
    %15 = arith.subf %9, %14 : vector<16x64xf32>
    %16 = arith.mulf %15, %15 : vector<16x64xf32>
    %cst_7 = arith.constant dense<0.000000e+00> : vector<16xf32>
    %17 = vector.multi_reduction <add>, %16, %cst_7 [1] : vector<16x64xf32> to vector<16xf32>
    %18 = vector.shape_cast %17 : vector<16xf32> to vector<16x1xf32>
    %cst_8 = arith.constant 6.400000e+01 : f32
    %19 = vector.broadcast %cst_8 : f32 to vector<16x1xf32>
    %20 = arith.divf %18, %19 : vector<16x1xf32>
    %cst_9 = arith.constant 9.99999974E-6 : f32
    %21 = vector.broadcast %cst_9 : f32 to vector<16x1xf32>
    %22 = arith.addf %20, %21 : vector<16x1xf32>
    %23 = math.rsqrt %22 : vector<16x1xf32>
    %24 = vector.broadcast %23 : vector<16x1xf32> to vector<16x64xf32>
    %25 = arith.mulf %15, %24 : vector<16x64xf32>
    %26 = vector.broadcast %2 : vector<1x64xf32> to vector<16x64xf32>
    %27 = arith.mulf %25, %26 : vector<16x64xf32>
    %28 = vector.broadcast %3 : vector<1x64xf32> to vector<16x64xf32>
    %29 = arith.addf %27, %28 : vector<16x64xf32>
    %cst_10 = arith.constant 0.707106769 : f32
    %30 = vector.broadcast %cst_10 : f32 to vector<16x64xf32>
    %31 = arith.mulf %29, %30 : vector<16x64xf32>
    %32 = math.erf %31 : vector<16x64xf32>
    %cst_11 = arith.constant 1.000000e+00 : f32
    %33 = vector.broadcast %cst_11 : f32 to vector<16x64xf32>
    %34 = arith.addf %32, %33 : vector<16x64xf32>
    %cst_12 = arith.constant 5.000000e-01 : f32
    %35 = vector.broadcast %cst_12 : f32 to vector<16x64xf32>
    %36 = arith.mulf %35, %34 : vector<16x64xf32>
    %37 = arith.truncf %29 : vector<16x64xf32> to vector<16x64xbf16>
    %38 = arith.truncf %36 : vector<16x64xf32> to vector<16x64xbf16>
    %39 = arith.mulf %37, %38 : vector<16x64xbf16>
    %40 = arith.truncf %4 : vector<1x64xf32> to vector<1x64xbf16>
    %41 = vector.broadcast %40 : vector<1x64xbf16> to vector<16x64xbf16>
    %42 = arith.mulf %39, %41 : vector<16x64xbf16>
    %43 = arith.extf %42 : vector<16x64xbf16> to vector<16x64xf32>
    %cst_13 = arith.constant dense<0.000000e+00> : vector<16xf32>
    %44 = vector.multi_reduction <add>, %43, %cst_13 [1] : vector<16x64xf32> to vector<16xf32>
    %45 = vector.shape_cast %44 : vector<16xf32> to vector<16x1xf32>
    %c0_14 = arith.constant 0 : index
    %c0_15 = arith.constant 0 : index
    %46 = memref.load %arg4[%c0_14, %c0_15] : memref<1x1xf32, #tpu.memory_space<smem>>
    %47 = vector.broadcast %46 : f32 to vector<16x1xf32>
    %48 = arith.addf %45, %47 : vector<16x1xf32>
    %49 = math.exp %48 : vector<16x1xf32>
    %c0_16 = arith.constant 0 : index
    %c0_17 = arith.constant 0 : index
    %50 = vector.load %arg5[%c0_16, %c0_17] : memref<16x1xf32, #tpu.memory_space<vmem>>, vector<16x1xf32>
    %51 = arith.fptosi %49 : vector<16x1xf32> to vector<16x1xi32>
    %52 = arith.fptosi %50 : vector<16x1xf32> to vector<16x1xi32>
    %53 = arith.cmpi eq, %51, %52 : vector<16x1xi32>
    %54 = arith.extui %53 : vector<16x1xi1> to vector<16x1xi32>
    %c0_18 = arith.constant 0 : index
    %c0_19 = arith.constant 0 : index
    %55 = vector.load %arg6[%c0_18, %c0_19] : memref<16x1xf32, #tpu.memory_space<vmem>>, vector<16x1xf32>
    tpu.vector_store %arg6[%c0_18, %c0_19], %49 {strides = array<i32>} : memref<16x1xf32, #tpu.memory_space<vmem>>, vector<16x1xf32>,
    %c0_20 = arith.constant 0 : index
    %c0_21 = arith.constant 0 : index
    %56 = vector.load %arg7[%c0_20, %c0_21] : memref<16x1xi32, #tpu.memory_space<vmem>>, vector<16x1xi32>
    tpu.vector_store %arg7[%c0_20, %c0_21], %54 {strides = array<i32>} : memref<16x1xi32, #tpu.memory_space<vmem>>, vector<16x1xi32>,
    %c16_i32 = arith.constant 16 : i32
    %57 = arith.muli %arg0, %c16_i32 : i32
    %58 = tpu.iota {dimensions = array<i32: 0>} : vector<16x1xi32>
    %59 = vector.broadcast %57 : i32 to vector<16x1xi32>
    %60 = arith.addi %59, %58 : vector<16x1xi32>
    %c2_i32 = arith.constant 2 : i32
    %61 = vector.broadcast %c2_i32 : i32 to vector<16x1xi32>
    %62 = arith.cmpi slt, %60, %61 : vector<16x1xi32>
    %63 = arith.subf %49, %50 : vector<16x1xf32>
    %64 = math.absf %63 : vector<16x1xf32>
    %cst_22 = arith.constant 0.000000e+00 : f32
    %65 = vector.broadcast %cst_22 : f32 to vector<16x1xf32>
    %66 = arith.select %62, %64, %65 : vector<16x1xi1>, vector<16x1xf32>
    %cst_23 = arith.constant dense<0.000000e+00> : vector<1xf32>
    %67 = vector.multi_reduction <add>, %66, %cst_23 [0] : vector<16x1xf32> to vector<1xf32>
    %68 = vector.shape_cast %67 : vector<1xf32> to vector<1x1xf32>
    %c0_i32 = arith.constant 0 : i32
    %69 = vector.broadcast %c0_i32 : i32 to vector<16x1xi32>
    %70 = arith.select %62, %54, %69 : vector<16x1xi1>, vector<16x1xi32>
    %71 = arith.sitofp %70 : vector<16x1xi32> to vector<16x1xf32>
    %cst_24 = arith.constant dense<0.000000e+00> : vector<1xf32>
    %72 = vector.multi_reduction <add>, %71, %cst_24 [0] : vector<16x1xf32> to vector<1xf32>
    %73 = vector.shape_cast %72 : vector<1xf32> to vector<1x1xf32>
    %c0_i32_25 = arith.constant 0 : i32
    %74 = arith.cmpi eq, %arg0, %c0_i32_25 : i32
    %75 = arith.extui %74 : i1 to i32
    %c0_i32_26 = arith.constant 0 : i32
    %76 = arith.cmpi ne, %75, %c0_i32_26 : i32
    scf.if %76 {
      %cst_37 = arith.constant 0.000000e+00 : f32
      %86 = vector.broadcast %cst_37 : f32 to vector<1x1xf32>
      %c0_38 = arith.constant 0 : index
      %c0_39 = arith.constant 0 : index
      %87 = vector.load %arg8[%c0_38, %c0_39] : memref<1x1xf32, #tpu.memory_space<vmem>>, vector<1x1xf32>
      tpu.vector_store %arg8[%c0_38, %c0_39], %86 {strides = array<i32>} : memref<1x1xf32, #tpu.memory_space<vmem>>, vector<1x1xf32>,
      %cst_40 = arith.constant 0.000000e+00 : f32
      %88 = vector.broadcast %cst_40 : f32 to vector<1x1xf32>
      %c0_41 = arith.constant 0 : index
      %c0_42 = arith.constant 0 : index
      %89 = vector.load %arg9[%c0_41, %c0_42] : memref<1x1xf32, #tpu.memory_space<vmem>>, vector<1x1xf32>
      tpu.vector_store %arg9[%c0_41, %c0_42], %88 {strides = array<i32>} : memref<1x1xf32, #tpu.memory_space<vmem>>, vector<1x1xf32>,
    } else {
    }
    %c0_27 = arith.constant 0 : index
    %c0_28 = arith.constant 0 : index
    %77 = vector.load %arg8[%c0_27, %c0_28] : memref<1x1xf32, #tpu.memory_space<vmem>>, vector<1x1xf32>
    %78 = arith.addf %77, %68 : vector<1x1xf32>
    %c0_29 = arith.constant 0 : index
    %c0_30 = arith.constant 0 : index
    %79 = vector.load %arg8[%c0_29, %c0_30] : memref<1x1xf32, #tpu.memory_space<vmem>>, vector<1x1xf32>
    tpu.vector_store %arg8[%c0_29, %c0_30], %78 {strides = array<i32>} : memref<1x1xf32, #tpu.memory_space<vmem>>, vector<1x1xf32>,
    %c0_31 = arith.constant 0 : index
    %c0_32 = arith.constant 0 : index
    %80 = vector.load %arg9[%c0_31, %c0_32] : memref<1x1xf32, #tpu.memory_space<vmem>>, vector<1x1xf32>
    %81 = arith.addf %80, %73 : vector<1x1xf32>
    %c0_33 = arith.constant 0 : index
    %c0_34 = arith.constant 0 : index
    %82 = vector.load %arg9[%c0_33, %c0_34] : memref<1x1xf32, #tpu.memory_space<vmem>>, vector<1x1xf32>
    tpu.vector_store %arg9[%c0_33, %c0_34], %81 {strides = array<i32>} : memref<1x1xf32, #tpu.memory_space<vmem>>, vector<1x1xf32>,
    %c0_i32_35 = arith.constant 0 : i32
    %83 = arith.cmpi eq, %arg0, %c0_i32_35 : i32
    %84 = arith.extui %83 : i1 to i32
    %c0_i32_36 = arith.constant 0 : i32
    %85 = arith.cmpi ne, %84, %c0_i32_36 : i32
    scf.if %85 {
      %c0_37 = arith.constant 0 : index
      %c0_38 = arith.constant 0 : index
      %86 = vector.load %arg8[%c0_37, %c0_38] : memref<1x1xf32, #tpu.memory_space<vmem>>, vector<1x1xf32>
      %cst_39 = arith.constant 5.000000e-01 : f32
      %87 = vector.broadcast %cst_39 : f32 to vector<1x1xf32>
      %88 = arith.mulf %86, %87 : vector<1x1xf32>
      %c0_40 = arith.constant 0 : index
      %c0_41 = arith.constant 0 : index
      %89 = vector.load %arg8[%c0_40, %c0_41] : memref<1x1xf32, #tpu.memory_space<vmem>>, vector<1x1xf32>
      tpu.vector_store %arg8[%c0_40, %c0_41], %88 {strides = array<i32>} : memref<1x1xf32, #tpu.memory_space<vmem>>, vector<1x1xf32>,
      %c0_42 = arith.constant 0 : index
      %c0_43 = arith.constant 0 : index
      %90 = vector.load %arg9[%c0_42, %c0_43] : memref<1x1xf32, #tpu.memory_space<vmem>>, vector<1x1xf32>
      %cst_44 = arith.constant 5.000000e-01 : f32
      %91 = vector.broadcast %cst_44 : f32 to vector<1x1xf32>
      %92 = arith.mulf %90, %91 : vector<1x1xf32>
      %c0_45 = arith.constant 0 : index
      %c0_46 = arith.constant 0 : index
      %93 = vector.load %arg9[%c0_45, %c0_46] : memref<1x1xf32, #tpu.memory_space<vmem>>, vector<1x1xf32>
      tpu.vector_store %arg9[%c0_45, %c0_46], %92 {strides = array<i32>} : memref<1x1xf32, #tpu.memory_space<vmem>>, vector<1x1xf32>,
    } else {
    }
    return
  }
  func.func @transform_0(%arg0: i32) -> (i32, i32) {
    %c0_i32 = arith.constant 0 : i32
    %c0_i32_0 = arith.constant 0 : i32
    return %arg0, %c0_i32 : i32, i32
  }
  func.func @transform_1(%arg0: i32) -> (i32, i32) {
    %c0_i32 = arith.constant 0 : i32
    %c0_i32_0 = arith.constant 0 : i32
    %c0_i32_1 = arith.constant 0 : i32
    return %c0_i32, %c0_i32_0 : i32, i32
  }
  func.func @transform_2(%arg0: i32) -> (i32, i32) {
    %c0_i32 = arith.constant 0 : i32
    %c0_i32_0 = arith.constant 0 : i32
    %c0_i32_1 = arith.constant 0 : i32
    return %c0_i32, %c0_i32_0 : i32, i32
  }
  func.func @transform_3(%arg0: i32) -> (i32, i32) {
    %c0_i32 = arith.constant 0 : i32
    %c0_i32_0 = arith.constant 0 : i32
    %c0_i32_1 = arith.constant 0 : i32
    return %c0_i32, %c0_i32_0 : i32, i32
  }
  func.func @transform_4(%arg0: i32) -> (i32, i32) {
    %c0_i32 = arith.constant 0 : i32
    %c0_i32_0 = arith.constant 0 : i32
    return %arg0, %c0_i32 : i32, i32
  }
  func.func @transform_5(%arg0: i32) -> (i32, i32) {
    %c0_i32 = arith.constant 0 : i32
    %c0_i32_0 = arith.constant 0 : i32
    return %arg0, %c0_i32 : i32, i32
  }
  func.func @transform_6(%arg0: i32) -> (i32, i32) {
    %c0_i32 = arith.constant 0 : i32
    %c0_i32_0 = arith.constant 0 : i32
    return %arg0, %c0_i32 : i32, i32
  }
  func.func @transform_7(%arg0: i32) -> (i32, i32) {
    %c0_i32 = arith.constant 0 : i32
    %c0_i32_0 = arith.constant 0 : i32
    %c0_i32_1 = arith.constant 0 : i32
    return %c0_i32, %c0_i32_0 : i32, i32
  }
  func.func @transform_8(%arg0: i32) -> (i32, i32) {
    %c0_i32 = arith.constant 0 : i32
    %c0_i32_0 = arith.constant 0 : i32
    %c0_i32_1 = arith.constant 0 : i32
    return %c0_i32, %c0_i32_0 : i32, i32
  }
}

</mosaic_0001>

<llo_original>
// kernel: tpu_custom_call.1
$region0: #{tpu_custom_call.1}
  #allocation0 [shape = 'u32[]', space=smem, size = 0x4, offset = 0x4, fixed_abs, tag = 'smem constant byte address 0x4 - core index']
  #allocation1 [shape = 'u32[72,128]{1,0:T(1,128)}', space=vmem, size = 0x9000, scoped, tag = 'internal scratch']
  #allocation2 [shape = 'f32[1,1]{1,0:T(1,128)S(6)}', space=smem, size = 0x200, scoped, tag = 'scoped memory for tpu_custom_call.1']
  %s0 = inlined_call_operand.hbm [shape: bf16[16,32], index: 0, kind: input, shape index: {}]
  %s1 = inlined_call_operand.vmem [shape: bf16[32,64], index: 1, kind: input, shape index: {}]
  %s2 = inlined_call_operand.vmem [shape: f32[4,64], index: 2, kind: input, shape index: {}]
  %s3 = inlined_call_operand.<no memory space> [shape: f32[1,1], index: 3, kind: input, shape index: {}]
  %s4 = inlined_call_operand.vmem [shape: f32[16,1], index: 4, kind: input, shape index: {}]
  %s5 = inlined_call_operand.vmem [shape: f32[16,1], index: 5, kind: output, shape index: {0}]
  %s6 = inlined_call_operand.vmem [shape: s32[16,1], index: 6, kind: output, shape index: {1}]
  %s7 = inlined_call_operand.hbm [shape: f32[1,1], index: 7, kind: output, shape index: {2}]
  %s8 = inlined_call_operand.hbm [shape: f32[1,1], index: 8, kind: output, shape index: {3}]
  %9 = xla_tuple %s5, %s6, %s7, %s8
  %s10 = sld [smem:[#allocation0]]
  $region66: #{tpu_custom_call.1} parent=0
    _
  %s12 = ssub.s32 1, %s10
  %s13 = scalar_select 0, %s12, %s10
  %14 = sst [smem:[#allocation2]] %s3
  $region1: #{tpu_custom_call.1} parent=0
    #allocation3 [shape = 'u8[4096]{0}', space=vmem, size = 0x1000, scoped, tag = 'input window, operand 0, single buffered']
    #allocation4 [shape = 's32[1]{0}', space=sflag, size = 0x4, scoped, tag = 'scoped memory for tpu_custom_call.1']
    #allocation5 [shape = 's32[1]{0}', space=sflag, size = 0x4, scoped, tag = 'scoped memory for tpu_custom_call.1']
    #allocation6 [shape = 'u8[512]{0}', space=vmem, size = 0x400, scoped, tag = 'output window, operand 2, single buffered']
    #allocation7 [shape = 'u8[512]{0}', space=vmem, size = 0x400, scoped, tag = 'output window, operand 3, single buffered']
    #allocation8 [shape = 's32[1]{0}', space=sflag, size = 0x4, scoped, tag = 'scoped memory for tpu_custom_call.1']
    %15 = vsyncpa [#allocation4], 0
    %16 = vsyncpa [#allocation5], 0
    %17 = vsyncpa [#allocation8], 0
    // Predicated region
    $region2: #{tpu_custom_call.1} parent=1 // pred_check
      _
    $region3: #{tpu_custom_call.1} parent=1 // pred_check_branch
      %19 = sbr.rel (0) target = $region5
    $region4: #{tpu_custom_call.1} parent=1 // pred_region
      %21 = vsyncadd [#allocation4], 0
      %s22 = sshll.u32 %s0, 4
      %s23 = int_to_ptr.hbm [resolvable:$true] %s22
      %s24 = sshll.u32 [#allocation3], 4
      %s25 = int_to_ptr.vmem [resolvable:$true] %s24
      %30 = dma.hbm_to_vmem [thread:$0]  %s23, 128, %s25, [#allocation4], 64, 64, 4
    $region5: #{tpu_custom_call.1} parent=1 // pred_fallthru
      _
    // Predicated region
    $region6: #{tpu_custom_call.1} parent=1 // pred_check
      _
    $region7: #{tpu_custom_call.1} parent=1 // pred_check_branch
      %32 = sbr.rel (0) target = $region9
    $region8: #{tpu_custom_call.1} parent=1 // pred_region
      _
    $region9: #{tpu_custom_call.1} parent=1 // pred_fallthru
      _
    // Predicated region
    $region10: #{tpu_custom_call.1} parent=1 // pred_check
      _
    $region11: #{tpu_custom_call.1} parent=1 // pred_check_branch
      %34 = sbr.rel (0) target = $region13
    $region12: #{tpu_custom_call.1} parent=1 // pred_region
      _
    $region13: #{tpu_custom_call.1} parent=1 // pred_fallthru
      _
    // Predicated region
    $region14: #{tpu_custom_call.1} parent=1 // pred_check
      _
    $region15: #{tpu_custom_call.1} parent=1 // pred_check_branch
      %36 = sbr.rel (0) target = $region17
    $region16: #{tpu_custom_call.1} parent=1 // pred_region
      _
    $region17: #{tpu_custom_call.1} parent=1 // pred_fallthru
      _
    // Predicated region
    $region18: #{tpu_custom_call.1} parent=1 // pred_check
      _
    $region19: #{tpu_custom_call.1} parent=1 // pred_check_branch
      %38 = sbr.rel (0) target = $region21
    $region20: #{tpu_custom_call.1} parent=1 // pred_region
      _
    $region21: #{tpu_custom_call.1} parent=1 // pred_fallthru
      _
    // Predicated region
    $region22: #{tpu_custom_call.1} parent=1 // pred_check
      _
    $region23: #{tpu_custom_call.1} parent=1 // pred_check_branch
      %40 = sbr.rel (0) target = $region25
    $region24: #{tpu_custom_call.1} parent=1 // pred_region
      %42 = dma.done [#allocation4], 128
    $region25: #{tpu_custom_call.1} parent=1 // pred_fallthru
      _
    %v44 = vld [vmem:[%s2] sm:$0xf]
    %v45 = vld [vmem:[#allocation3] sm:$0xf]
    %v46 = vld [vmem:[#allocation3 + $0x4] sm:$0xf]
    %v47 = vld [vmem:[%s1] sm:$0xf]
    %v48 = vld [vmem:[%s1 + $0x4] sm:$0xf]
    %v49 = vld [vmem:[%s1 + $0x8] sm:$0xf]
    %v50 = vld [vmem:[%s1 + $0xc] sm:$0xf]
    %v51 = vperm.slane %v44, 0
    %v54 = vunpack.c.l.b16 %v45
    %v55 = vunpack.c.l.b16 %v46
    %v56 = vpack.c.b16 %v55, %v54
    %v61 = vunpack.c.l.b16 %v47
    %v62 = vunpack.c.l.b16 %v48
    %v63 = vunpack.c.l.b16 %v49
    %v64 = vunpack.c.l.b16 %v50
    %v65 = vpack.c.b16 %v62, %v61
    %v66 = vpack.c.b16 %v64, %v63
    %vm69 = vcmask 261120
    %v71 = vsel %vm69, %v56, 0
    %73 = vmatpush.bf16.msra.mxu0 0
    %74 = vmatpush.bf16.msra.mxu0 0
    %75 = vmatpush.bf16.msra.mxu0 0
    %76 = vmatpush.bf16.msra.mxu0 0
    %77 = vmatpush.bf16.msra.mxu0 0
    %78 = vmatpush.bf16.msra.mxu0 0
    %79 = vmatpush.bf16.msra.mxu0 %v66
    %80 = vmatpush.bf16.msra.mxu0 %v65
    %81 = vmatmul.bf16.gmra.mxu0 %v71
    %v82 = vpop.f32.mrf.mxu0
    %v83 = vadd.f32 %v51, %v82
    %v84 = vpop.f32.mrf.mxu0
    %v85 = vadd.f32 %v51, %v84
    %86 = vdwg.mxu0
    %vm87 = vcmask 523264
    %v88 = vsel %vm87, %v83, 0.0
    %89 = vadd.xlane.f32.xlu0 %v88
    %v90 = vpop.xlane.xlu0 %89
    %v91 = vsel %vm87, %v85, 0.0
    %92 = vadd.xlane.f32.xlu0 %v91
    %v93 = vpop.xlane.xlu0 %92
    %v94 = vrcp.pop 64.0
    %v95 = vmul.f32 64.0, %v94
    %v96 = vsub.f32 1.0, %v95
    %v97 = vmul.f32 %v94, %v96
    %v98 = vadd.f32 %v94, %v97
    %vm99 = vweird.f32 %v94
    %v100 = vsel %vm99, %v94, %v98
    %v101 = vmul.f32 %v90, %v100
    %v102 = vmul.f32 %v93, %v100
    %v103 = vsub.f32 %v83, %v101
    %v104 = vsub.f32 %v85, %v102
    %v105 = vmul.f32 %v103, %v103
    %v106 = vmul.f32 %v104, %v104
    %v107 = vsel %vm87, %v105, 0.0
    %108 = vadd.xlane.f32.xlu0 %v107
    %v109 = vpop.xlane.xlu0 %108
    %v110 = vsel %vm87, %v106, 0.0
    %111 = vadd.xlane.f32.xlu0 %v110
    %v112 = vpop.xlane.xlu0 %111
    %v113 = vmul.f32 %v109, %v100
    %v114 = vmul.f32 %v112, %v100
    %v115 = vadd.f32 %v113, 1e-05
    %v116 = vadd.f32 %v114, 1e-05
    %v117 = vrsqrt.pop %v115
    %v118 = vmul.f32 %v117, %v115
    %v119 = vmul.f32 %v118, %v117
    %v120 = vmul.f32 0.5, %v119
    %v121 = vsub.f32 1.5, %v120
    %v122 = vmul.f32 %v117, %v121
    %vm123 = vweird.f32 %v115
    %vm124 = vweird.f32 %v117
    %vm125 = vmor %vm123, %vm124
    %v126 = vsel %vm125, %v117, %v122
    %v127 = vrsqrt.pop %v116
    %v128 = vmul.f32 %v127, %v116
    %v129 = vmul.f32 %v128, %v127
    %v130 = vmul.f32 0.5, %v129
    %v131 = vsub.f32 1.5, %v130
    %v132 = vmul.f32 %v127, %v131
    %vm133 = vweird.f32 %v116
    %vm134 = vweird.f32 %v127
    %vm135 = vmor %vm133, %vm134
    %v136 = vsel %vm135, %v127, %v132
    %v137 = vmul.f32 %v103, %v126
    %v138 = vmul.f32 %v104, %v136
    %v139 = vperm.slane %v44, 1
    %v140 = vmul.f32 %v137, %v139
    %v141 = vmul.f32 %v138, %v139
    %v142 = vperm.slane %v44, 2
    %v143 = vadd.f32 %v140, %v142
    %v144 = vadd.f32 %v141, %v142
    %v145 = vmul.f32 %v143, 0.70710677
    %v146 = vmul.f32 %v144, 0.70710677
    %v147 = vmul.f32 %v145, %v145
    %v148 = vmin.f32 16.0, %v147
    %v149 = vmul.f32 %v148, 2.1237322e-06
    %v150 = vadd.f32 %v149, 0.00028619796
    %v151 = vmul.f32 %v148, %v150
    %v152 = vadd.f32 %v151, 0.0036580483
    %v153 = vmul.f32 %v148, %v152
    %v154 = vadd.f32 %v153, 0.05243302
    %v155 = vmul.f32 %v148, %v154
    %v156 = vadd.f32 %v155, 0.18741608
    %v157 = vmul.f32 %v148, %v156
    %v158 = vadd.f32 %v157, 1.1283791
    %v159 = vmul.f32 %v145, %v158
    %v160 = vmul.f32 %v148, 3.8918573e-05
    %v161 = vadd.f32 %v160, 0.001143296
    %v162 = vmul.f32 %v148, %v161
    %v163 = vadd.f32 %v162, 0.014752088
    %v164 = vmul.f32 %v148, %v163
    %v165 = vadd.f32 %v164, 0.112945676
    %v166 = vmul.f32 %v148, %v165
    %v167 = vadd.f32 %v166, 0.4994258
    %v168 = vmul.f32 %v148, %v167
    %v169 = vadd.f32 %v168, 1.0
    %v170 = vrcp.pop %v169
    %v171 = vmul.f32 %v169, %v170
    %v172 = vsub.f32 1.0, %v171
    %v173 = vmul.f32 %v170, %v172
    %v174 = vadd.f32 %v170, %v173
    %vm175 = vweird.f32 %v169
    %vm176 = vweird.f32 %v170
    %vm177 = vmor %vm175, %vm176
    %v178 = vsel %vm177, %v170, %v174
    %v179 = vand.u32 2147483647, %v169
    %vm180 = vcmp.eq.f32.partialorder %v179, 8.507059e+37
    %v181 = vand.u32 %v169, 2147483648
    %v182 = vor.u32 1.1754944e-38, %v181
    %v183 = vsel %vm180, %v182, %v178
    %v184 = vmul.f32 %v159, %v183
    %v185 = vmin.f32 %v184, 1.0
    %v186 = vmax.f32 %v185, -1.0
    %v187 = vmul.f32 %v146, %v146
    %v188 = vmin.f32 16.0, %v187
    %v189 = vmul.f32 %v188, 2.1237322e-06
    %v190 = vadd.f32 %v189, 0.00028619796
    %v191 = vmul.f32 %v188, %v190
    %v192 = vadd.f32 %v191, 0.0036580483
    %v193 = vmul.f32 %v188, %v192
    %v194 = vadd.f32 %v193, 0.05243302
    %v195 = vmul.f32 %v188, %v194
    %v196 = vadd.f32 %v195, 0.18741608
    %v197 = vmul.f32 %v188, %v196
    %v198 = vadd.f32 %v197, 1.1283791
    %v199 = vmul.f32 %v146, %v198
    %v200 = vmul.f32 %v188, 3.8918573e-05
    %v201 = vadd.f32 %v200, 0.001143296
    %v202 = vmul.f32 %v188, %v201
    %v203 = vadd.f32 %v202, 0.014752088
    %v204 = vmul.f32 %v188, %v203
    %v205 = vadd.f32 %v204, 0.112945676
    %v206 = vmul.f32 %v188, %v205
    %v207 = vadd.f32 %v206, 0.4994258
    %v208 = vmul.f32 %v188, %v207
    %v209 = vadd.f32 %v208, 1.0
    %v210 = vrcp.pop %v209
    %v211 = vmul.f32 %v209, %v210
    %v212 = vsub.f32 1.0, %v211
    %v213 = vmul.f32 %v210, %v212
    %v214 = vadd.f32 %v210, %v213
    %vm215 = vweird.f32 %v209
    %vm216 = vweird.f32 %v210
    %vm217 = vmor %vm215, %vm216
    %v218 = vsel %vm217, %v210, %v214
    %v219 = vand.u32 2147483647, %v209
    %vm220 = vcmp.eq.f32.partialorder %v219, 8.507059e+37
    %v221 = vand.u32 %v209, 2147483648
    %v222 = vor.u32 1.1754944e-38, %v221
    %v223 = vsel %vm220, %v222, %v218
    %v224 = vmul.f32 %v199, %v223
    %v225 = vmin.f32 %v224, 1.0
    %v226 = vmax.f32 %v225, -1.0
    %v227 = vadd.f32 %v186, 1.0
    %v228 = vadd.f32 %v226, 1.0
    %v229 = vmul.f32 %v227, 0.5
    %v230 = vmul.f32 %v228, 0.5
    %v231 = vpack.c.bf16 %v143, %v143
    %v232 = vpack.c.bf16 %v144, %v144
    %v233 = vpack.c.bf16 %v229, %v229
    %v234 = vpack.c.bf16 %v230, %v230
    %v235 = vunpack.c.l.bf16 %v231
    %v236 = vunpack.c.l.bf16 %v232
    %v237 = vunpack.c.l.bf16 %v233
    %v238 = vunpack.c.l.bf16 %v234
    %v239 = vmul.f32 %v235, %v237
    %v240 = vmul.f32 %v236, %v238
    %v241 = vpack.c.bf16 %v239, %v239
    %v242 = vpack.c.bf16 %v240, %v240
    %v243 = vpack.c.bf16 %v44, %v44
    %v245 = vshrl.u32 %v243, 16
    %v246 = vpack.i.b16 %v245, %v245
    %v248 = vperm.slane %v246, 1
    %v249 = vunpack.c.l.bf16 %v241
    %v250 = vunpack.c.l.bf16 %v242
    %v251 = vunpack.c.l.bf16 %v248
    %v252 = vmul.f32 %v249, %v251
    %v253 = vmul.f32 %v250, %v251
    %v254 = vpack.c.bf16 %v253, %v252
    %v255 = vunpack.c.l.bf16 %v254
    %v256 = vunpack.c.h.bf16 %v254
    %v257 = vsel %vm87, %v255, 0.0
    %258 = vadd.xlane.f32.xlu0 %v257
    %v259 = vpop.xlane.xlu0 %258
    %v260 = vsel %vm87, %v256, 0.0
    %261 = vadd.xlane.f32.xlu0 %v260
    %v262 = vpop.xlane.xlu0 %261
    %s263 = sld [smem:[#allocation2]]
    %v264 = vstv %s263
    %v265 = vadd.f32 %v259, %v264
    %v266 = vadd.f32 %v262, %v264
    %v267 = vmul.f32 %v265, 1.442695
    %v268 = vpow.pop %v267
    %v269 = vmul.f32 %v266, 1.442695
    %v270 = vpow.pop %v269
    %v271 = vld [vmem:[%s4] sm:$0xff]
    %v272 = vld [vmem:[%s4 + $0x8] sm:$0xff]
    %v273 = vcvt.f32.s32.to.zero.pseudo %v268
    %v274 = vcvt.f32.s32.to.zero.pseudo %v270
    %v275 = vcvt.f32.s32.to.zero.pseudo %v271
    %v276 = vcvt.f32.s32.to.zero.pseudo %v272
    %vm277 = vcmp.eq.s32.totalorder %v273, %v275
    %vm278 = vcmp.eq.s32.totalorder %v274, %v276
    %v279 = vsel %vm277, 1, 0
    %v280 = vsel %vm278, 1, 0
    %vm281 = vcmask 7168
    %282 = vst.msk [vmem:[%s5] sm:$0xff] %vm281, %v268
    %283 = vst.msk [vmem:[%s5 + $0x8] sm:$0xff] %vm281, %v270
    %284 = vst.msk [vmem:[%s6] sm:$0xff] %vm281, %v279
    %285 = vst.msk [vmem:[%s6 + $0x8] sm:$0xff] %vm281, %v280
    %s286 = smul.u32 0, 16
    %v287 = vlaneseq
    %v288 = vshrl.u32 %v287, 7
    %v289 = vadd.s32 %v288, 8
    %v290 = vstv %s286
    %v291 = vadd.s32 %v290, %v288
    %v292 = vadd.s32 %v290, %v289
    %vm293 = vcmp.lt.s32.totalorder %v291, 2
    %vm294 = vcmp.lt.s32.totalorder %v292, 2
    %v295 = vsub.f32 %v268, %v271
    %v296 = vsub.f32 %v270, %v272
    %v297 = vand.u32 2147483647, %v295
    %v298 = vand.u32 2147483647, %v296
    %v299 = vsel %vm293, %v297, 0.0
    %v300 = vsel %vm294, %v298, 0.0
    %v301 = vsel %vm281, %v299, 0.0
    %v302 = vsel %vm281, %v300, 0.0
    %v303 = vadd.f32 %v301, %v302
    %v304 = vrot.slane %v303, 4
    %v305 = vadd.f32 %v303, %v304
    %v306 = vrot.slane %v305, 2
    %v307 = vadd.f32 %v305, %v306
    %v308 = vrot.slane %v307, 1
    %v309 = vadd.f32 %v307, %v308
    %v310 = vsel %vm293, %v279, 0
    %v311 = vsel %vm294, %v280, 0
    %v312 = vcvt.s32.f32 %v310
    %v313 = vcvt.s32.f32 %v311
    %v314 = vsel %vm281, %v312, 0.0
    %v315 = vsel %vm281, %v313, 0.0
    %v316 = vadd.f32 %v314, %v315
    %v317 = vrot.slane %v316, 4
    %v318 = vadd.f32 %v316, %v317
    %v319 = vrot.slane %v318, 2
    %v320 = vadd.f32 %v318, %v319
    %v321 = vrot.slane %v320, 1
    %v322 = vadd.f32 %v320, %v321
    %p323 = scmp.eq.s32.totalorder 0, 0
    // Predicated region
    $region26: #{tpu_custom_call.1} parent=1 // pred_check
      %p324 = pneg %p323
    $region27: #{tpu_custom_call.1} parent=1 // pred_check_branch
      %326 = sbr.rel (%p324) target = $region29
    $region28: #{tpu_custom_call.1} parent=1 // pred_region
      %vm327 = vcmask 0
      %328 = vst.msk [vmem:[#allocation6] sm:$0x1] %vm327, 0.0
      %329 = vst.msk [vmem:[#allocation7] sm:$0x1] %vm327, 0.0
    $region29: #{tpu_custom_call.1} parent=1 // pred_fallthru
      _
    %v330 = vld [vmem:[#allocation6] sm:$0x1]
    %v331 = vadd.f32 %v330, %v309
    %vm332 = vcmask 0
    %333 = vst.msk [vmem:[#allocation6] sm:$0x1] %vm332, %v331
    %v334 = vld [vmem:[#allocation7] sm:$0x1]
    %v335 = vadd.f32 %v334, %v322
    %336 = vst.msk [vmem:[#allocation7] sm:$0x1] %vm332, %v335
    // Predicated region
    $region30: #{tpu_custom_call.1} parent=1 // pred_check
      %p337 = pneg %p323
    $region31: #{tpu_custom_call.1} parent=1 // pred_check_branch
      %339 = sbr.rel (%p337) target = $region33
    $region32: #{tpu_custom_call.1} parent=1 // pred_region
      %v340 = vld [vmem:[#allocation6] sm:$0x1]
      %v341 = vmul.f32 %v340, 0.5
      %342 = vst.msk [vmem:[#allocation6] sm:$0x1] %vm332, %v341
      %v343 = vld [vmem:[#allocation7] sm:$0x1]
      %v344 = vmul.f32 %v343, 0.5
      %345 = vst.msk [vmem:[#allocation7] sm:$0x1] %vm332, %v344
    $region33: #{tpu_custom_call.1} parent=1 // pred_fallthru
      _
    // Predicated region
    $region34: #{tpu_custom_call.1} parent=1 // pred_check
      _
    $region35: #{tpu_custom_call.1} parent=1 // pred_check_branch
      %347 = sbr.rel (0) target = $region37
    $region36: #{tpu_custom_call.1} parent=1 // pred_region
      _
    $region37: #{tpu_custom_call.1} parent=1 // pred_fallthru
      _
    // Predicated region
    $region38: #{tpu_custom_call.1} parent=1 // pred_check
      _
    $region39: #{tpu_custom_call.1} parent=1 // pred_check_branch
      %349 = sbr.rel (0) target = $region41
    $region40: #{tpu_custom_call.1} parent=1 // pred_region
      _
    $region41: #{tpu_custom_call.1} parent=1 // pred_fallthru
      _
    // Predicated region
    $region42: #{tpu_custom_call.1} parent=1 // pred_check
      _
    $region43: #{tpu_custom_call.1} parent=1 // pred_check_branch
      %351 = sbr.rel (0) target = $region45
    $region44: #{tpu_custom_call.1} parent=1 // pred_region
      %353 = vsyncadd [#allocation5], 0
      %s355 = sshll.u32 [#allocation6], 4
      %s356 = int_to_ptr.vmem [resolvable:$true] %s355
      %s357 = sshll.u32 %s7, 4
      %s358 = int_to_ptr.hbm [resolvable:$true] %s357
      %360 = dma.vmem_to_hbm [thread:$0]  %s356, 16, %s358, [#allocation5]
    $region45: #{tpu_custom_call.1} parent=1 // pred_fallthru
      _
    // Predicated region
    $region46: #{tpu_custom_call.1} parent=1 // pred_check
      _
    $region47: #{tpu_custom_call.1} parent=1 // pred_check_branch
      %362 = sbr.rel (0) target = $region49
    $region48: #{tpu_custom_call.1} parent=1 // pred_region
      %364 = vsyncadd [#allocation8], 0
      %s366 = sshll.u32 [#allocation7], 4
      %s367 = int_to_ptr.vmem [resolvable:$true] %s366
      %s368 = sshll.u32 %s8, 4
      %s369 = int_to_ptr.hbm [resolvable:$true] %s368
      %371 = dma.vmem_to_hbm [thread:$0]  %s367, 16, %s369, [#allocation8]
    $region49: #{tpu_custom_call.1} parent=1 // pred_fallthru
      _
    // Predicated region
    $region50: #{tpu_custom_call.1} parent=1 // pred_check
      _
    $region51: #{tpu_custom_call.1} parent=1 // pred_check_branch
      %373 = sbr.rel (0) target = $region53
    $region52: #{tpu_custom_call.1} parent=1 // pred_region
      _
    $region53: #{tpu_custom_call.1} parent=1 // pred_fallthru
      _
    // Predicated region
    $region54: #{tpu_custom_call.1} parent=1 // pred_check
      _
    $region55: #{tpu_custom_call.1} parent=1 // pred_check_branch
      %375 = sbr.rel (0) target = $region57
    $region56: #{tpu_custom_call.1} parent=1 // pred_region
      _
    $region57: #{tpu_custom_call.1} parent=1 // pred_fallthru
      _
    // Predicated region
    $region58: #{tpu_custom_call.1} parent=1 // pred_check
      _
    $region59: #{tpu_custom_call.1} parent=1 // pred_check_branch
      %377 = sbr.rel (0) target = $region61
    $region60: #{tpu_custom_call.1} parent=1 // pred_region
      %379 = dma.done [#allocation5], 16
    $region61: #{tpu_custom_call.1} parent=1 // pred_fallthru
      _
    // Predicated region
    $region62: #{tpu_custom_call.1} parent=1 // pred_check
      _
    $region63: #{tpu_custom_call.1} parent=1 // pred_check_branch
      %381 = sbr.rel (0) target = $region65
    $region64: #{tpu_custom_call.1} parent=1 // pred_region
      %383 = dma.done [#allocation8], 16
    $region65: #{tpu_custom_call.1} parent=1 // pred_fallthru
      _
    %384 = vsyncpa [#allocation4], 1
    %385 = vsyncpa [#allocation5], 1
    %386 = vsyncpa [#allocation8], 1

// kernel: tpu_custom_call.1
$region0: #{tpu_custom_call.1}
  #allocation0 [shape = 'u32[]', space=smem, size = 0x4, offset = 0x4, fixed_abs, tag = 'smem constant byte address 0x4 - core index']
  #allocation1 [shape = 'u32[72,128]{1,0:T(1,128)}', space=vmem, size = 0x9000, scoped, tag = 'internal scratch']
  #allocation2 [shape = 'f32[1,1]{1,0:T(1,128)S(6)}', space=smem, size = 0x200, scoped, tag = 'scoped memory for tpu_custom_call.1']
  %s0 = inlined_call_operand.hbm [shape: bf16[16,32], index: 0, kind: input, shape index: {}]
  %s1 = inlined_call_operand.vmem [shape: bf16[32,64], index: 1, kind: input, shape index: {}]
  %s2 = inlined_call_operand.vmem [shape: f32[4,64], index: 2, kind: input, shape index: {}]
  %s3 = inlined_call_operand.<no memory space> [shape: f32[1,1], index: 3, kind: input, shape index: {}]
  %s4 = inlined_call_operand.vmem [shape: f32[16,1], index: 4, kind: input, shape index: {}]
  %s5 = inlined_call_operand.vmem [shape: f32[16,1], index: 5, kind: output, shape index: {0}]
  %s6 = inlined_call_operand.vmem [shape: s32[16,1], index: 6, kind: output, shape index: {1}]
  %s7 = inlined_call_operand.hbm [shape: f32[1,1], index: 7, kind: output, shape index: {2}]
  %s8 = inlined_call_operand.hbm [shape: f32[1,1], index: 8, kind: output, shape index: {3}]
  %9 = xla_tuple %s5, %s6, %s7, %s8
  %s10 = sld [smem:[#allocation0]]
  $region66: #{tpu_custom_call.1} parent=0
    _
  %s12 = ssub.s32 1, %s10
  %s13 = scalar_select 0, %s12, %s10
  %14 = sst [smem:[#allocation2]] %s3
  $region1: #{tpu_custom_call.1} parent=0
    #allocation3 [shape = 'u8[4096]{0}', space=vmem, size = 0x1000, scoped, tag = 'input window, operand 0, single buffered']
    #allocation4 [shape = 's32[1]{0}', space=sflag, size = 0x4, scoped, tag = 'scoped memory for tpu_custom_call.1']
    #allocation5 [shape = 's32[1]{0}', space=sflag, size = 0x4, scoped, tag = 'scoped memory for tpu_custom_call.1']
    #allocation6 [shape = 'u8[512]{0}', space=vmem, size = 0x400, scoped, tag = 'output window, operand 2, single buffered']
    #allocation7 [shape = 'u8[512]{0}', space=vmem, size = 0x400, scoped, tag = 'output window, operand 3, single buffered']
    #allocation8 [shape = 's32[1]{0}', space=sflag, size = 0x4, scoped, tag = 'scoped memory for tpu_custom_call.1']
    %15 = vsyncpa [#allocation4], 0
    %16 = vsyncpa [#allocation5], 0
    %17 = vsyncpa [#allocation8], 0
    // Predicated region
    $region2: #{tpu_custom_call.1} parent=1 // pred_check
      _
    $region3: #{tpu_custom_call.1} parent=1 // pred_check_branch
      %19 = sbr.rel (0) target = $region5
    $region4: #{tpu_custom_call.1} parent=1 // pred_region
      %21 = vsyncadd [#allocation4], 0
      %s22 = sshll.u32 %s0, 4
      %s23 = int_to_ptr.hbm [resolvable:$true] %s22
      %s24 = sshll.u32 [#allocation3], 4
      %s25 = int_to_ptr.vmem [resolvable:$true] %s24
      %30 = dma.hbm_to_vmem [thread:$0]  %s23, 128, %s25, [#allocation4], 64, 64, 4
    $region5: #{tpu_custom_call.1} parent=1 // pred_fallthru
      _
    // Predicated region
    $region6: #{tpu_custom_call.1} parent=1 // pred_check
      _
    $region7: #{tpu_custom_call.1} parent=1 // pred_check_branch
      %32 = sbr.rel (0) target = $region9
    $region8: #{tpu_custom_call.1} parent=1 // pred_region
      _
    $region9: #{tpu_custom_call.1} parent=1 // pred_fallthru
      _
    // Predicated region
    $region10: #{tpu_custom_call.1} parent=1 // pred_check
      _
    $region11: #{tpu_custom_call.1} parent=1 // pred_check_branch
      %34 = sbr.rel (0) target = $region13
    $region12: #{tpu_custom_call.1} parent=1 // pred_region
      _
    $region13: #{tpu_custom_call.1} parent=1 // pred_fallthru
      _
    // Predicated region
    $region14: #{tpu_custom_call.1} parent=1 // pred_check
      _
    $region15: #{tpu_custom_call.1} parent=1 // pred_check_branch
      %36 = sbr.rel (0) target = $region17
    $region16: #{tpu_custom_call.1} parent=1 // pred_region
      _
    $region17: #{tpu_custom_call.1} parent=1 // pred_fallthru
      _
    // Predicated region
    $region18: #{tpu_custom_call.1} parent=1 // pred_check
      _
    $region19: #{tpu_custom_call.1} parent=1 // pred_check_branch
      %38 = sbr.rel (0) target = $region21
    $region20: #{tpu_custom_call.1} parent=1 // pred_region
      _
    $region21: #{tpu_custom_call.1} parent=1 // pred_fallthru
      _
    // Predicated region
    $region22: #{tpu_custom_call.1} parent=1 // pred_check
      _
    $region23: #{tpu_custom_call.1} parent=1 // pred_check_branch
      %40 = sbr.rel (0) target = $region25
    $region24: #{tpu_custom_call.1} parent=1 // pred_region
      %42 = dma.done [#allocation4], 128
    $region25: #{tpu_custom_call.1} parent=1 // pred_fallthru
      _
    %v44 = vld [vmem:[%s2] sm:$0xf]
    %v45 = vld [vmem:[#allocation3] sm:$0xf]
    %v46 = vld [vmem:[#allocation3 + $0x4] sm:$0xf]
    %v47 = vld [vmem:[%s1] sm:$0xf]
    %v48 = vld [vmem:[%s1 + $0x4] sm:$0xf]
    %v49 = vld [vmem:[%s1 + $0x8] sm:$0xf]
    %v50 = vld [vmem:[%s1 + $0xc] sm:$0xf]
    %v51 = vperm.slane %v44, 0
    %v54 = vunpack.c.l.b16 %v45
    %v55 = vunpack.c.l.b16 %v46
    %v56 = vpack.c.b16 %v55, %v54
    %v61 = vunpack.c.l.b16 %v47
    %v62 = vunpack.c.l.b16 %v48
    %v63 = vunpack.c.l.b16 %v49
    %v64 = vunpack.c.l.b16 %v50
    %v65 = vpack.c.b16 %v62, %v61
    %v66 = vpack.c.b16 %v64, %v63
    %vm69 = vcmask 261120
    %v71 = vsel %vm69, %v56, 0
    %73 = vmatpush.bf16.msra.mxu0 0
    %74 = vmatpush.bf16.msra.mxu0 0
    %75 = vmatpush.bf16.msra.mxu0 0
    %76 = vmatpush.bf16.msra.mxu0 0
    %77 = vmatpush.bf16.msra.mxu0 0
    %78 = vmatpush.bf16.msra.mxu0 0
    %79 = vmatpush.bf16.msra.mxu0 %v66
    %80 = vmatpush.bf16.msra.mxu0 %v65
    %81 = vmatmul.bf16.gmra.mxu0 %v71
    %v82 = vpop.f32.mrf.mxu0
    %v83 = vadd.f32 %v51, %v82
    %v84 = vpop.f32.mrf.mxu0
    %v85 = vadd.f32 %v51, %v84
    %86 = vdwg.mxu0
    %vm87 = vcmask 523264
    %v88 = vsel %vm87, %v83, 0.0
    %89 = vadd.xlane.f32.xlu0 %v88
    %v90 = vpop.xlane.xlu0 %89
    %v91 = vsel %vm87, %v85, 0.0
    %92 = vadd.xlane.f32.xlu0 %v91
    %v93 = vpop.xlane.xlu0 %92
    %v94 = vrcp.pop 64.0
    %v95 = vmul.f32 64.0, %v94
    %v96 = vsub.f32 1.0, %v95
    %v97 = vmul.f32 %v94, %v96
    %v98 = vadd.f32 %v94, %v97
    %vm99 = vweird.f32 %v94
    %v100 = vsel %vm99, %v94, %v98
    %v101 = vmul.f32 %v90, %v100
    %v102 = vmul.f32 %v93, %v100
    %v103 = vsub.f32 %v83, %v101
    %v104 = vsub.f32 %v85, %v102
    %v105 = vmul.f32 %v103, %v103
    %v106 = vmul.f32 %v104, %v104
    %v107 = vsel %vm87, %v105, 0.0
    %108 = vadd.xlane.f32.xlu0 %v107
    %v109 = vpop.xlane.xlu0 %108
    %v110 = vsel %vm87, %v106, 0.0
    %111 = vadd.xlane.f32.xlu0 %v110
    %v112 = vpop.xlane.xlu0 %111
    %v113 = vmul.f32 %v109, %v100
    %v114 = vmul.f32 %v112, %v100
    %v115 = vadd.f32 %v113, 1e-05
    %v116 = vadd.f32 %v114, 1e-05
    %v117 = vrsqrt.pop %v115
    %v118 = vmul.f32 %v117, %v115
    %v119 = vmul.f32 %v118, %v117
    %v120 = vmul.f32 0.5, %v119
    %v121 = vsub.f32 1.5, %v120
    %v122 = vmul.f32 %v117, %v121
    %vm123 = vweird.f32 %v115
    %vm124 = vweird.f32 %v117
    %vm125 = vmor %vm123, %vm124
    %v126 = vsel %vm125, %v117, %v122
    %v127 = vrsqrt.pop %v116
    %v128 = vmul.f32 %v127, %v116
    %v129 = vmul.f32 %v128, %v127
    %v130 = vmul.f32 0.5, %v129
    %v131 = vsub.f32 1.5, %v130
    %v132 = vmul.f32 %v127, %v131
    %vm133 = vweird.f32 %v116
    %vm134 = vweird.f32 %v127
    %vm135 = vmor %vm133, %vm134
    %v136 = vsel %vm135, %v127, %v132
    %v137 = vmul.f32 %v103, %v126
    %v138 = vmul.f32 %v104, %v136
    %v139 = vperm.slane %v44, 1
    %v140 = vmul.f32 %v137, %v139
    %v141 = vmul.f32 %v138, %v139
    %v142 = vperm.slane %v44, 2
    %v143 = vadd.f32 %v140, %v142
    %v144 = vadd.f32 %v141, %v142
    %v145 = vmul.f32 %v143, 0.70710677
    %v146 = vmul.f32 %v144, 0.70710677
    %v147 = vmul.f32 %v145, %v145
    %v148 = vmin.f32 16.0, %v147
    %v149 = vmul.f32 %v148, 2.1237322e-06
    %v150 = vadd.f32 %v149, 0.00028619796
    %v151 = vmul.f32 %v148, %v150
    %v152 = vadd.f32 %v151, 0.0036580483
    %v153 = vmul.f32 %v148, %v152
    %v154 = vadd.f32 %v153, 0.05243302
    %v155 = vmul.f32 %v148, %v154
    %v156 = vadd.f32 %v155, 0.18741608
    %v157 = vmul.f32 %v148, %v156
    %v158 = vadd.f32 %v157, 1.1283791
    %v159 = vmul.f32 %v145, %v158
    %v160 = vmul.f32 %v148, 3.8918573e-05
    %v161 = vadd.f32 %v160, 0.001143296
    %v162 = vmul.f32 %v148, %v161
    %v163 = vadd.f32 %v162, 0.014752088
    %v164 = vmul.f32 %v148, %v163
    %v165 = vadd.f32 %v164, 0.112945676
    %v166 = vmul.f32 %v148, %v165
    %v167 = vadd.f32 %v166, 0.4994258
    %v168 = vmul.f32 %v148, %v167
    %v169 = vadd.f32 %v168, 1.0
    %v170 = vrcp.pop %v169
    %v171 = vmul.f32 %v169, %v170
    %v172 = vsub.f32 1.0, %v171
    %v173 = vmul.f32 %v170, %v172
    %v174 = vadd.f32 %v170, %v173
    %vm175 = vweird.f32 %v169
    %vm176 = vweird.f32 %v170
    %vm177 = vmor %vm175, %vm176
    %v178 = vsel %vm177, %v170, %v174
    %v179 = vand.u32 2147483647, %v169
    %vm180 = vcmp.eq.f32.partialorder %v179, 8.507059e+37
    %v181 = vand.u32 %v169, 2147483648
    %v182 = vor.u32 1.1754944e-38, %v181
    %v183 = vsel %vm180, %v182, %v178
    %v184 = vmul.f32 %v159, %v183
    %v185 = vmin.f32 %v184, 1.0
    %v186 = vmax.f32 %v185, -1.0
    %v187 = vmul.f32 %v146, %v146
    %v188 = vmin.f32 16.0, %v187
    %v189 = vmul.f32 %v188, 2.1237322e-06
    %v190 = vadd.f32 %v189, 0.00028619796
    %v191 = vmul.f32 %v188, %v190
    %v192 = vadd.f32 %v191, 0.0036580483
    %v193 = vmul.f32 %v188, %v192
    %v194 = vadd.f32 %v193, 0.05243302
    %v195 = vmul.f32 %v188, %v194
    %v196 = vadd.f32 %v195, 0.18741608
    %v197 = vmul.f32 %v188, %v196
    %v198 = vadd.f32 %v197, 1.1283791
    %v199 = vmul.f32 %v146, %v198
    %v200 = vmul.f32 %v188, 3.8918573e-05
    %v201 = vadd.f32 %v200, 0.001143296
    %v202 = vmul.f32 %v188, %v201
    %v203 = vadd.f32 %v202, 0.014752088
    %v204 = vmul.f32 %v188, %v203
    %v205 = vadd.f32 %v204, 0.112945676
    %v206 = vmul.f32 %v188, %v205
    %v207 = vadd.f32 %v206, 0.4994258
    %v208 = vmul.f32 %v188, %v207
    %v209 = vadd.f32 %v208, 1.0
    %v210 = vrcp.pop %v209
    %v211 = vmul.f32 %v209, %v210
    %v212 = vsub.f32 1.0, %v211
    %v213 = vmul.f32 %v210, %v212
    %v214 = vadd.f32 %v210, %v213
    %vm215 = vweird.f32 %v209
    %vm216 = vweird.f32 %v210
    %vm217 = vmor %vm215, %vm216
    %v218 = vsel %vm217, %v210, %v214
    %v219 = vand.u32 2147483647, %v209
    %vm220 = vcmp.eq.f32.partialorder %v219, 8.507059e+37
    %v221 = vand.u32 %v209, 2147483648
    %v222 = vor.u32 1.1754944e-38, %v221
    %v223 = vsel %vm220, %v222, %v218
    %v224 = vmul.f32 %v199, %v223
    %v225 = vmin.f32 %v224, 1.0
    %v226 = vmax.f32 %v225, -1.0
    %v227 = vadd.f32 %v186, 1.0
    %v228 = vadd.f32 %v226, 1.0
    %v229 = vmul.f32 %v227, 0.5
    %v230 = vmul.f32 %v228, 0.5
    %v231 = vpack.c.bf16 %v143, %v143
    %v232 = vpack.c.bf16 %v144, %v144
    %v233 = vpack.c.bf16 %v229, %v229
    %v234 = vpack.c.bf16 %v230, %v230
    %v235 = vunpack.c.l.bf16 %v231
    %v236 = vunpack.c.l.bf16 %v232
    %v237 = vunpack.c.l.bf16 %v233
    %v238 = vunpack.c.l.bf16 %v234
    %v239 = vmul.f32 %v235, %v237
    %v240 = vmul.f32 %v236, %v238
    %v241 = vpack.c.bf16 %v239, %v239
    %v242 = vpack.c.bf16 %v240, %v240
    %v243 = vpack.c.bf16 %v44, %v44
    %v245 = vshrl.u32 %v243, 16
    %v246 = vpack.i.b16 %v245, %v245
    %v248 = vperm.slane %v246, 1
    %v249 = vunpack.c.l.bf16 %v241
    %v250 = vunpack.c.l.bf16 %v242
    %v251 = vunpack.c.l.bf16 %v248
    %v252 = vmul.f32 %v249, %v251
    %v253 = vmul.f32 %v250, %v251
    %v254 = vpack.c.bf16 %v253, %v252
    %v255 = vunpack.c.l.bf16 %v254
    %v256 = vunpack.c.h.bf16 %v254
    %v257 = vsel %vm87, %v255, 0.0
    %258 = vadd.xlane.f32.xlu0 %v257
    %v259 = vpop.xlane.xlu0 %258
    %v260 = vsel %vm87, %v256, 0.0
    %261 = vadd.xlane.f32.xlu0 %v260
    %v262 = vpop.xlane.xlu0 %261
    %s263 = sld [smem:[#allocation2]]
    %v264 = vstv %s263
    %v265 = vadd.f32 %v259, %v264
    %v266 = vadd.f32 %v262, %v264
    %v267 = vmul.f32 %v265, 1.442695
    %v268 = vpow.pop %v267
    %v269 = vmul.f32 %v266, 1.442695
    %v270 = vpow.pop %v269
    %v271 = vld [vmem:[%s4] sm:$0xff]
    %v272 = vld [vmem:[%s4 + $0x8] sm:$0xff]
    %v273 = vcvt.f32.s32.to.zero.pseudo %v268
    %v274 = vcvt.f32.s32.to.zero.pseudo %v270
    %v275 = vcvt.f32.s32.to.zero.pseudo %v271
    %v276 = vcvt.f32.s32.to.zero.pseudo %v272
    %vm277 = vcmp.eq.s32.totalorder %v273, %v275
    %vm278 = vcmp.eq.s32.totalorder %v274, %v276
    %v279 = vsel %vm277, 1, 0
    %v280 = vsel %vm278, 1, 0
    %vm281 = vcmask 7168
    %282 = vst.msk [vmem:[%s5] sm:$0xff] %vm281, %v268
    %283 = vst.msk [vmem:[%s5 + $0x8] sm:$0xff] %vm281, %v270
    %284 = vst.msk [vmem:[%s6] sm:$0xff] %vm281, %v279
    %285 = vst.msk [vmem:[%s6 + $0x8] sm:$0xff] %vm281, %v280
    %s286 = smul.u32 0, 16
    %v287 = vlaneseq
    %v288 = vshrl.u32 %v287, 7
    %v289 = vadd.s32 %v288, 8
    %v290 = vstv %s286
    %v291 = vadd.s32 %v290, %v288
    %v292 = vadd.s32 %v290, %v289
    %vm293 = vcmp.lt.s32.totalorder %v291, 2
    %vm294 = vcmp.lt.s32.totalorder %v292, 2
    %v295 = vsub.f32 %v268, %v271
    %v296 = vsub.f32 %v270, %v272
    %v297 = vand.u32 2147483647, %v295
    %v298 = vand.u32 2147483647, %v296
    %v299 = vsel %vm293, %v297, 0.0
    %v300 = vsel %vm294, %v298, 0.0
    %v301 = vsel %vm281, %v299, 0.0
    %v302 = vsel %vm281, %v300, 0.0
    %v303 = vadd.f32 %v301, %v302
    %v304 = vrot.slane %v303, 4
    %v305 = vadd.f32 %v303, %v304
    %v306 = vrot.slane %v305, 2
    %v307 = vadd.f32 %v305, %v306
    %v308 = vrot.slane %v307, 1
    %v309 = vadd.f32 %v307, %v308
    %v310 = vsel %vm293, %v279, 0
    %v311 = vsel %vm294, %v280, 0
    %v312 = vcvt.s32.f32 %v310
    %v313 = vcvt.s32.f32 %v311
    %v314 = vsel %vm281, %v312, 0.0
    %v315 = vsel %vm281, %v313, 0.0
    %v316 = vadd.f32 %v314, %v315
    %v317 = vrot.slane %v316, 4
    %v318 = vadd.f32 %v316, %v317
    %v319 = vrot.slane %v318, 2
    %v320 = vadd.f32 %v318, %v319
    %v321 = vrot.slane %v320, 1
    %v322 = vadd.f32 %v320, %v321
    %p323 = scmp.eq.s32.totalorder 0, 0
    // Predicated region
    $region26: #{tpu_custom_call.1} parent=1 // pred_check
      %p324 = pneg %p323
    $region27: #{tpu_custom_call.1} parent=1 // pred_check_branch
      %326 = sbr.rel (%p324) target = $region29
    $region28: #{tpu_custom_call.1} parent=1 // pred_region
      %vm327 = vcmask 0
      %328 = vst.msk [vmem:[#allocation6] sm:$0x1] %vm327, 0.0
      %329 = vst.msk [vmem:[#allocation7] sm:$0x1] %vm327, 0.0
    $region29: #{tpu_custom_call.1} parent=1 // pred_fallthru
      _
    %v330 = vld [vmem:[#allocation6] sm:$0x1]
    %v331 = vadd.f32 %v330, %v309
    %vm332 = vcmask 0
    %333 = vst.msk [vmem:[#allocation6] sm:$0x1] %vm332, %v331
    %v334 = vld [vmem:[#allocation7] sm:$0x1]
    %v335 = vadd.f32 %v334, %v322
    %336 = vst.msk [vmem:[#allocation7] sm:$0x1] %vm332, %v335
    // Predicated region
    $region30: #{tpu_custom_call.1} parent=1 // pred_check
      %p337 = pneg %p323
    $region31: #{tpu_custom_call.1} parent=1 // pred_check_branch
      %339 = sbr.rel (%p337) target = $region33
    $region32: #{tpu_custom_call.1} parent=1 // pred_region
      %v340 = vld [vmem:[#allocation6] sm:$0x1]
      %v341 = vmul.f32 %v340, 0.5
      %342 = vst.msk [vmem:[#allocation6] sm:$0x1] %vm332, %v341
      %v343 = vld [vmem:[#allocation7] sm:$0x1]
      %v344 = vmul.f32 %v343, 0.5
      %345 = vst.msk [vmem:[#allocation7] sm:$0x1] %vm332, %v344
    $region33: #{tpu_custom_call.1} parent=1 // pred_fallthru
      _
    // Predicated region
    $region34: #{tpu_custom_call.1} parent=1 // pred_check
      _
    $region35: #{tpu_custom_call.1} parent=1 // pred_check_branch
      %347 = sbr.rel (0) target = $region37
    $region36: #{tpu_custom_call.1} parent=1 // pred_region
      _
    $region37: #{tpu_custom_call.1} parent=1 // pred_fallthru
      _
    // Predicated region
    $region38: #{tpu_custom_call.1} parent=1 // pred_check
      _
    $region39: #{tpu_custom_call.1} parent=1 // pred_check_branch
      %349 = sbr.rel (0) target = $region41
    $region40: #{tpu_custom_call.1} parent=1 // pred_region
      _
    $region41: #{tpu_custom_call.1} parent=1 // pred_fallthru
      _
    // Predicated region
    $region42: #{tpu_custom_call.1} parent=1 // pred_check
      _
    $region43: #{tpu_custom_call.1} parent=1 // pred_check_branch
      %351 = sbr.rel (0) target = $region45
    $region44: #{tpu_custom_call.1} parent=1 // pred_region
      %353 = vsyncadd [#allocation5], 0
      %s355 = sshll.u32 [#allocation6], 4
      %s356 = int_to_ptr.vmem [resolvable:$true] %s355
      %s357 = sshll.u32 %s7, 4
      %s358 = int_to_ptr.hbm [resolvable:$true] %s357
      %360 = dma.vmem_to_hbm [thread:$0]  %s356, 16, %s358, [#allocation5]
    $region45: #{tpu_custom_call.1} parent=1 // pred_fallthru
      _
    // Predicated region
    $region46: #{tpu_custom_call.1} parent=1 // pred_check
      _
    $region47: #{tpu_custom_call.1} parent=1 // pred_check_branch
      %362 = sbr.rel (0) target = $region49
    $region48: #{tpu_custom_call.1} parent=1 // pred_region
      %364 = vsyncadd [#allocation8], 0
      %s366 = sshll.u32 [#allocation7], 4
      %s367 = int_to_ptr.vmem [resolvable:$true] %s366
      %s368 = sshll.u32 %s8, 4
      %s369 = int_to_ptr.hbm [resolvable:$true] %s368
      %371 = dma.vmem_to_hbm [thread:$0]  %s367, 16, %s369, [#allocation8]
    $region49: #{tpu_custom_call.1} parent=1 // pred_fallthru
      _
    // Predicated region
    $region50: #{tpu_custom_call.1} parent=1 // pred_check
      _
    $region51: #{tpu_custom_call.1} parent=1 // pred_check_branch
      %373 = sbr.rel (0) target = $region53
    $region52: #{tpu_custom_call.1} parent=1 // pred_region
      _
    $region53: #{tpu_custom_call.1} parent=1 // pred_fallthru
      _
    // Predicated region
    $region54: #{tpu_custom_call.1} parent=1 // pred_check
      _
    $region55: #{tpu_custom_call.1} parent=1 // pred_check_branch
      %375 = sbr.rel (0) target = $region57
    $region56: #{tpu_custom_call.1} parent=1 // pred_region
      _
    $region57: #{tpu_custom_call.1} parent=1 // pred_fallthru
      _
    // Predicated region
    $region58: #{tpu_custom_call.1} parent=1 // pred_check
      _
    $region59: #{tpu_custom_call.1} parent=1 // pred_check_branch
      %377 = sbr.rel (0) target = $region61
    $region60: #{tpu_custom_call.1} parent=1 // pred_region
      %379 = dma.done [#allocation5], 16
    $region61: #{tpu_custom_call.1} parent=1 // pred_fallthru
      _
    // Predicated region
    $region62: #{tpu_custom_call.1} parent=1 // pred_check
      _
    $region63: #{tpu_custom_call.1} parent=1 // pred_check_branch
      %381 = sbr.rel (0) target = $region65
    $region64: #{tpu_custom_call.1} parent=1 // pred_region
      %383 = dma.done [#allocation8], 16
    $region65: #{tpu_custom_call.1} parent=1 // pred_fallthru
      _
    %384 = vsyncpa [#allocation4], 1
    %385 = vsyncpa [#allocation5], 1
    %386 = vsyncpa [#allocation8], 1

</llo_original>
